<compile_context>
chip_gen: v7x
topology: tpu7x:2x2x1
jax: 0.10.0
libtpu: 0.0.40
codegen_flags: <defaults>
</compile_context>

<pallas_src>
import jax
import jax.numpy as jnp
from jax.experimental import pallas as pl
from jax.experimental.pallas import tpu as pltpu


def _round_up(n, m):
    return ((n + m - 1) // m) * m


def taylor_layer_kernel(x_ref, wc_ref, o_ref):
    # x_ref:  (TB, I_pad)              f32  (pipelined over the batch grid)
    # wc_ref: ((K+1)*I_pad, O_pad)     f32  (constant block index -> resident)
    # o_ref:  (TB, O_pad)              f32
    t = jnp.tanh(x_ref[...])                      # EUP; tanh_range folded into wc
    i_pad = t.shape[1]
    kp1 = wc_ref.shape[0] // i_pad

    # Power planes t^0 .. t^K concatenated along lanes -> (TB, (K+1)*I_pad).
    # Concatenation is at 128-aligned lane boundaries (pure vreg placement).
    planes = [jnp.ones_like(t)]
    for _ in range(kp1 - 1):
        planes.append(planes[-1] * t)
    p = jnp.concatenate(planes, axis=-1)

    # Single MXU matmul: per-(o,i) weighting + reduction over (k, i).
    o_ref[...] = jnp.dot(
        p, wc_ref[...],
        preferred_element_type=jnp.float32,
        precision=jax.lax.Precision.HIGHEST,
    )


def custom_taylor_layer(x, weights, coeffs, tanh_range, *, tb=256):
    """x: (B, I) f32, weights: (O, I) f32, coeffs: (K+1, O, I) f32,
    tanh_range: (1,) f32.  Returns (B, O) f32 matching CustomTaylorLayer."""
    B, I = x.shape
    O = weights.shape[0]
    kp1 = coeffs.shape[0]
    r = tanh_range.reshape(())

    # Pre-fold tanh_range and weights into the coefficient planes:
    #   wc[k, o, i] = weights[o, i] * coeffs[k, o, i] * r**k
    rpow = jnp.stack([r ** k for k in range(kp1)])             # integer_pow: safe for r<0
    wc = coeffs * weights[None, :, :] * rpow[:, None, None]    # (K+1, O, I)

    # Lane-dense padding: last dims -> multiples of 128; batch -> tile multiple.
    i_pad = _round_up(max(I, 128), 128)
    o_pad = _round_up(max(O, 128), 128)
    tb = min(tb, _round_up(B, 8))
    b_pad = _round_up(B, tb)

    x_p = jnp.zeros((b_pad, i_pad), jnp.float32).at[:B, :I].set(x.astype(jnp.float32))
    wc_p = jnp.zeros((kp1, o_pad, i_pad), jnp.float32).at[:, :O, :I].set(
        wc.astype(jnp.float32))
    # Layout so wc_mat[k * i_pad + i, o] matches the concatenated power planes.
    wc_mat = jnp.transpose(wc_p, (0, 2, 1)).reshape(kp1 * i_pad, o_pad)

    grid = (b_pad // tb,)
    out_p = pl.pallas_call(
        taylor_layer_kernel,
        out_shape=jax.ShapeDtypeStruct((b_pad, o_pad), jnp.float32),
        grid_spec=pltpu.PrefetchScalarGridSpec(
            num_scalar_prefetch=0,
            grid=grid,
            in_specs=[
                pl.BlockSpec((tb, i_pad), lambda i: (i, 0)),           # x tile (pipelined)
                pl.BlockSpec((kp1 * i_pad, o_pad), lambda i: (0, 0)),  # folded W*C (resident)
            ],
            out_specs=pl.BlockSpec((tb, o_pad), lambda i: (i, 0)),
        ),
        compiler_params=pltpu.CompilerParams(
            dimension_semantics=("parallel",)),
    )(x_p, wc_mat)
    return out_p[:B, :O]


def reference(x, weights, coeffs, tanh_range):
    # Pure elementwise Horner reference mirroring the PyTorch module.
    t = jnp.tanh(x) * tanh_range[0]                            # (B, I)
    K = coeffs.shape[0] - 1
    val = jnp.broadcast_to(coeffs[K][None], (x.shape[0],) + coeffs.shape[1:])
    for k in range(K - 1, -1, -1):
        val = val * t[:, None, :] + coeffs[k][None]
    return jnp.sum(val * weights[None, :, :], axis=-1)         # einsum('boi,oi->bo')


if __name__ == "__main__":
    B, I, O, order = 10, 16, 32, 3                             # small, non-multiple batch

    key = jax.random.PRNGKey(0)
    k1, k2, k3 = jax.random.split(key, 3)
    x = jax.random.normal(k1, (B, I), dtype=jnp.float32)
    weights = jax.random.normal(k2, (O, I), dtype=jnp.float32)
    # One TaylorBasisFunction per (output, input) pair, coefficients ~ N(0,1)*0.1.
    coeffs_oik = jax.random.normal(k3, (O, I, order + 1), dtype=jnp.float32) * 0.1
    coeffs = jnp.transpose(coeffs_oik, (2, 0, 1))              # (order+1, O, I)
    tanh_range = jnp.ones((1,), dtype=jnp.float32)

    out = custom_taylor_layer(x, weights, coeffs, tanh_range)
    out = jax.block_until_ready(out)

    ref = reference(x, weights, coeffs, tanh_range)
    assert out.shape == (B, O)
    assert jnp.allclose(out, ref, atol=1e-4, rtol=1e-4)
    print("KERNEL_OK")
</pallas_src>

<mosaic_0001>
module attributes {stable_mosaic.version = 11 : i64} {
  func.func @taylor_layer_kernel(%arg0: i32, %arg1: memref<16x128xf32, #tpu.memory_space<vmem>>, %arg2: memref<512x128xf32, #tpu.memory_space<vmem>>, %arg3: memref<16x128xf32, #tpu.memory_space<vmem>>) attributes {dimension_semantics = [#tpu.dimension_semantics<parallel>], iteration_bounds = array<i64: 1>, scalar_prefetch = 0 : i64, scratch_operands = 0 : i64, tpu.core_type = #tpu.core_type<tc>, window_params = [{transform_indices = @transform_0, window_bounds = array<i64: 16, 128>}, {pipeline_mode = #tpu.pipeline_mode<synchronous>, transform_indices = @transform_1, window_bounds = array<i64: 512, 128>}, {transform_indices = @transform_2, window_bounds = array<i64: 16, 128>}]} {
    %c0 = arith.constant 0 : index
    %c0_0 = arith.constant 0 : index
    %0 = vector.load %arg1[%c0, %c0_0] : memref<16x128xf32, #tpu.memory_space<vmem>>, vector<16x128xf32>
    %1 = math.tanh %0 : vector<16x128xf32>
    %cst = arith.constant 1.000000e+00 : f32
    %2 = vector.broadcast %cst : f32 to vector<16x128xf32>
    %3 = arith.mulf %2, %1 : vector<16x128xf32>
    %4 = arith.mulf %3, %1 : vector<16x128xf32>
    %5 = arith.mulf %4, %1 : vector<16x128xf32>
    %6 = tpu.concatenate %2, %3, %4, %5 in 1 : vector<16x128xf32>, vector<16x128xf32>, vector<16x128xf32>, vector<16x128xf32> -> vector<16x512xf32>
    %c0_1 = arith.constant 0 : index
    %c0_2 = arith.constant 0 : index
    %7 = vector.load %arg2[%c0_1, %c0_2] : memref<512x128xf32, #tpu.memory_space<vmem>>, vector<512x128xf32>
    %cst_3 = arith.constant dense<0.000000e+00> : vector<16x128xf32>
    %8 = tpu.matmul %6, %7, %cst_3 {dimension_numbers = #tpu.dot_dimension_numbers<[1], [0], [0], [1], [0, 0, 1, 1], [], []>, precision = #tpu.contract_precision<fp32>} : vector<16x512xf32>, vector<512x128xf32>, vector<16x128xf32> -> vector<16x128xf32>
    %c0_4 = arith.constant 0 : index
    %c0_5 = arith.constant 0 : index
    %9 = vector.load %arg3[%c0_4, %c0_5] : memref<16x128xf32, #tpu.memory_space<vmem>>, vector<16x128xf32>
    tpu.vector_store %arg3[%c0_4, %c0_5], %8 {strides = array<i32>} : memref<16x128xf32, #tpu.memory_space<vmem>>, vector<16x128xf32>,
    return
  }
  func.func @transform_0(%arg0: i32) -> (i32, i32) {
    %c0_i32 = arith.constant 0 : i32
    %c0_i32_0 = arith.constant 0 : i32
    return %arg0, %c0_i32 : i32, i32
  }
  func.func @transform_1(%arg0: i32) -> (i32, i32) {
    %c0_i32 = arith.constant 0 : i32
    %c0_i32_0 = arith.constant 0 : i32
    %c0_i32_1 = arith.constant 0 : i32
    return %c0_i32, %c0_i32_0 : i32, i32
  }
  func.func @transform_2(%arg0: i32) -> (i32, i32) {
    %c0_i32 = arith.constant 0 : i32
    %c0_i32_0 = arith.constant 0 : i32
    return %arg0, %c0_i32 : i32, i32
  }
}

</mosaic_0001>

<llo_original>
// kernel: tpu_custom_call.1
$region0: #{tpu_custom_call.1}
  #allocation0 [shape = 'u32[]', space=smem, size = 0x4, offset = 0x4, fixed_abs, tag = 'smem constant byte address 0x4 - core index']
  #allocation1 [shape = 'u32[144,128]{1,0:T(1,128)}', space=vmem, size = 0x12000, scoped, tag = 'internal scratch']
  %s0 = inlined_call_operand.hbm [shape: f32[16,128], index: 0, kind: input, shape index: {}]
  %s1 = inlined_call_operand.hbm [shape: f32[512,128], index: 1, kind: input, shape index: {}]
  %s2 = inlined_call_operand.hbm [shape: f32[16,128], index: 2, kind: output, shape index: {}]
  %s3 = sld [smem:[#allocation0]]
  $region26: #{tpu_custom_call.1} parent=0
    _
  %s5 = ssub.s32 1, %s3
  %s6 = scalar_select 0, %s5, %s3
  $region1: #{tpu_custom_call.1} parent=0
    #allocation2 [shape = 'u8[8192]{0}', space=vmem, size = 0x2000, scoped, tag = 'input window, operand 0, single buffered']
    #allocation3 [shape = 's32[1]{0}', space=sflag, size = 0x4, scoped, tag = 'scoped memory for tpu_custom_call.1']
    #allocation4 [shape = 's32[1]{0}', space=sflag, size = 0x4, scoped, tag = 'scoped memory for tpu_custom_call.1']
    #allocation5 [shape = 'u8[262144]{0}', space=vmem, size = 0x40000, scoped, tag = 'input window, operand 1, single buffered']
    #allocation6 [shape = 's32[1]{0}', space=sflag, size = 0x4, scoped, tag = 'scoped memory for tpu_custom_call.1']
    #allocation7 [shape = 'u8[8192]{0}', space=vmem, size = 0x2000, scoped, tag = 'output window, operand 0, single buffered']
    %7 = vsyncpa [#allocation3], 0
    %8 = vsyncpa [#allocation6], 0
    %9 = vsyncpa [#allocation4], 0
    // Predicated region
    $region2: #{tpu_custom_call.1} parent=1 // pred_check
      _
    $region3: #{tpu_custom_call.1} parent=1 // pred_check_branch
      %11 = sbr.rel (0) target = $region5
    $region4: #{tpu_custom_call.1} parent=1 // pred_region
      %s13 = ssub.s32 256, 256
      %14 = vsyncadd [#allocation3], %s13
      %s15 = sshll.u32 [#allocation2], 4
      %s16 = int_to_ptr.vmem [resolvable:$true] %s15
      %21 = dma.hbm_to_vmem [thread:$0]  %s0, 256, %s16, [#allocation3], 128, 128, 8
    $region5: #{tpu_custom_call.1} parent=1 // pred_fallthru
      _
    // Predicated region
    $region6: #{tpu_custom_call.1} parent=1 // pred_check
      _
    $region7: #{tpu_custom_call.1} parent=1 // pred_check_branch
      %23 = sbr.rel (0) target = $region9
    $region8: #{tpu_custom_call.1} parent=1 // pred_region
      %s25 = ssub.s32 8192, 8192
      %26 = vsyncadd [#allocation6], %s25
      %s27 = sshll.u32 [#allocation5], 4
      %s28 = int_to_ptr.vmem [resolvable:$true] %s27
      %33 = dma.hbm_to_vmem [thread:$0]  %s1, 8192, %s28, [#allocation6], 128, 128, 8
    $region9: #{tpu_custom_call.1} parent=1 // pred_fallthru
      _
    // Predicated region
    $region10: #{tpu_custom_call.1} parent=1 // pred_check
      _
    $region11: #{tpu_custom_call.1} parent=1 // pred_check_branch
      %35 = sbr.rel (0) target = $region13
    $region12: #{tpu_custom_call.1} parent=1 // pred_region
      %36 = dma.done [#allocation3], 256
    $region13: #{tpu_custom_call.1} parent=1 // pred_fallthru
      _
    // Predicated region
    $region14: #{tpu_custom_call.1} parent=1 // pred_check
      _
    $region15: #{tpu_custom_call.1} parent=1 // pred_check_branch
      %38 = sbr.rel (0) target = $region17
    $region16: #{tpu_custom_call.1} parent=1 // pred_region
      %39 = dma.done [#allocation6], 8192
    $region17: #{tpu_custom_call.1} parent=1 // pred_fallthru
      _
    %v40 = vld [vmem:[#allocation2] sm:$0xff]
    %v41 = vld [vmem:[#allocation2 + $0x8] sm:$0xff]
    %v42 = vtanh.pop %v40
    %v43 = vtanh.pop %v41
    %v44 = vmul.f32 %v42, %v42
    %v45 = vmul.f32 %v43, %v43
    %v46 = vmul.f32 %v44, %v42
    %v47 = vmul.f32 %v45, %v43
    %v48 = vld [vmem:[#allocation5] sm:$0xff]
    %v49 = vld [vmem:[#allocation5 + $0x8] sm:$0xff]
    %v50 = vld [vmem:[#allocation5 + $0x10] sm:$0xff]
    %v51 = vld [vmem:[#allocation5 + $0x18] sm:$0xff]
    %v52 = vld [vmem:[#allocation5 + $0x20] sm:$0xff]
    %v53 = vld [vmem:[#allocation5 + $0x28] sm:$0xff]
    %v54 = vld [vmem:[#allocation5 + $0x30] sm:$0xff]
    %v55 = vld [vmem:[#allocation5 + $0x38] sm:$0xff]
    %v56 = vld [vmem:[#allocation5 + $0x40] sm:$0xff]
    %v57 = vld [vmem:[#allocation5 + $0x48] sm:$0xff]
    %v58 = vld [vmem:[#allocation5 + $0x50] sm:$0xff]
    %v59 = vld [vmem:[#allocation5 + $0x58] sm:$0xff]
    %v60 = vld [vmem:[#allocation5 + $0x60] sm:$0xff]
    %v61 = vld [vmem:[#allocation5 + $0x68] sm:$0xff]
    %v62 = vld [vmem:[#allocation5 + $0x70] sm:$0xff]
    %v63 = vld [vmem:[#allocation5 + $0x78] sm:$0xff]
    %v64 = vld [vmem:[#allocation5 + $0x80] sm:$0xff]
    %v65 = vld [vmem:[#allocation5 + $0x88] sm:$0xff]
    %v66 = vld [vmem:[#allocation5 + $0x90] sm:$0xff]
    %v67 = vld [vmem:[#allocation5 + $0x98] sm:$0xff]
    %v68 = vld [vmem:[#allocation5 + $0xa0] sm:$0xff]
    %v69 = vld [vmem:[#allocation5 + $0xa8] sm:$0xff]
    %v70 = vld [vmem:[#allocation5 + $0xb0] sm:$0xff]
    %v71 = vld [vmem:[#allocation5 + $0xb8] sm:$0xff]
    %v72 = vld [vmem:[#allocation5 + $0xc0] sm:$0xff]
    %v73 = vld [vmem:[#allocation5 + $0xc8] sm:$0xff]
    %v74 = vld [vmem:[#allocation5 + $0xd0] sm:$0xff]
    %v75 = vld [vmem:[#allocation5 + $0xd8] sm:$0xff]
    %v76 = vld [vmem:[#allocation5 + $0xe0] sm:$0xff]
    %v77 = vld [vmem:[#allocation5 + $0xe8] sm:$0xff]
    %v78 = vld [vmem:[#allocation5 + $0xf0] sm:$0xff]
    %v79 = vld [vmem:[#allocation5 + $0xf8] sm:$0xff]
    %v80 = vld [vmem:[#allocation5 + $0x100] sm:$0xff]
    %v81 = vld [vmem:[#allocation5 + $0x108] sm:$0xff]
    %v82 = vld [vmem:[#allocation5 + $0x110] sm:$0xff]
    %v83 = vld [vmem:[#allocation5 + $0x118] sm:$0xff]
    %v84 = vld [vmem:[#allocation5 + $0x120] sm:$0xff]
    %v85 = vld [vmem:[#allocation5 + $0x128] sm:$0xff]
    %v86 = vld [vmem:[#allocation5 + $0x130] sm:$0xff]
    %v87 = vld [vmem:[#allocation5 + $0x138] sm:$0xff]
    %v88 = vld [vmem:[#allocation5 + $0x140] sm:$0xff]
    %v89 = vld [vmem:[#allocation5 + $0x148] sm:$0xff]
    %v90 = vld [vmem:[#allocation5 + $0x150] sm:$0xff]
    %v91 = vld [vmem:[#allocation5 + $0x158] sm:$0xff]
    %v92 = vld [vmem:[#allocation5 + $0x160] sm:$0xff]
    %v93 = vld [vmem:[#allocation5 + $0x168] sm:$0xff]
    %v94 = vld [vmem:[#allocation5 + $0x170] sm:$0xff]
    %v95 = vld [vmem:[#allocation5 + $0x178] sm:$0xff]
    %v96 = vld [vmem:[#allocation5 + $0x180] sm:$0xff]
    %v97 = vld [vmem:[#allocation5 + $0x188] sm:$0xff]
    %v98 = vld [vmem:[#allocation5 + $0x190] sm:$0xff]
    %v99 = vld [vmem:[#allocation5 + $0x198] sm:$0xff]
    %v100 = vld [vmem:[#allocation5 + $0x1a0] sm:$0xff]
    %v101 = vld [vmem:[#allocation5 + $0x1a8] sm:$0xff]
    %v102 = vld [vmem:[#allocation5 + $0x1b0] sm:$0xff]
    %v103 = vld [vmem:[#allocation5 + $0x1b8] sm:$0xff]
    %v104 = vld [vmem:[#allocation5 + $0x1c0] sm:$0xff]
    %v105 = vld [vmem:[#allocation5 + $0x1c8] sm:$0xff]
    %v106 = vld [vmem:[#allocation5 + $0x1d0] sm:$0xff]
    %v107 = vld [vmem:[#allocation5 + $0x1d8] sm:$0xff]
    %v108 = vld [vmem:[#allocation5 + $0x1e0] sm:$0xff]
    %v109 = vld [vmem:[#allocation5 + $0x1e8] sm:$0xff]
    %v110 = vld [vmem:[#allocation5 + $0x1f0] sm:$0xff]
    %v111 = vld [vmem:[#allocation5 + $0x1f8] sm:$0xff]
    %112 = vmatprep.subr.mxu0 0.0
    %v113 = vand.u32 %v48, 4294901760
    %114 = vmatpush1.msra.mxu0 %v113
    %115 = vmatprep.subr.mxu0 0.0
    %v116 = vand.u32 %v49, 4294901760
    %117 = vmatpush1.msra.mxu0 %v116
    %118 = vmatprep.subr.mxu0 0.0
    %v119 = vand.u32 %v50, 4294901760
    %120 = vmatpush1.msra.mxu0 %v119
    %121 = vmatprep.subr.mxu0 0.0
    %v122 = vand.u32 %v51, 4294901760
    %123 = vmatpush1.msra.mxu0 %v122
    %124 = vmatprep.subr.mxu0 0.0
    %v125 = vand.u32 %v52, 4294901760
    %126 = vmatpush1.msra.mxu0 %v125
    %127 = vmatprep.subr.mxu0 0.0
    %v128 = vand.u32 %v53, 4294901760
    %129 = vmatpush1.msra.mxu0 %v128
    %130 = vmatprep.subr.mxu0 0.0
    %v131 = vand.u32 %v54, 4294901760
    %132 = vmatpush1.msra.mxu0 %v131
    %133 = vmatprep.subr.mxu0 0.0
    %v134 = vand.u32 %v55, 4294901760
    %135 = vmatpush1.msra.mxu0 %v134
    %136 = vmatprep.subr.mxu0 0.0
    %v137 = vand.u32 %v56, 4294901760
    %138 = vmatpush1.msra.mxu0 %v137
    %139 = vmatprep.subr.mxu0 0.0
    %v140 = vand.u32 %v57, 4294901760
    %141 = vmatpush1.msra.mxu0 %v140
    %142 = vmatprep.subr.mxu0 0.0
    %v143 = vand.u32 %v58, 4294901760
    %144 = vmatpush1.msra.mxu0 %v143
    %145 = vmatprep.subr.mxu0 0.0
    %v146 = vand.u32 %v59, 4294901760
    %147 = vmatpush1.msra.mxu0 %v146
    %148 = vmatprep.subr.mxu0 0.0
    %v149 = vand.u32 %v60, 4294901760
    %150 = vmatpush1.msra.mxu0 %v149
    %151 = vmatprep.subr.mxu0 0.0
    %v152 = vand.u32 %v61, 4294901760
    %153 = vmatpush1.msra.mxu0 %v152
    %154 = vmatprep.subr.mxu0 0.0
    %v155 = vand.u32 %v62, 4294901760
    %156 = vmatpush1.msra.mxu0 %v155
    %157 = vmatprep.subr.mxu0 0.0
    %v158 = vand.u32 %v63, 4294901760
    %159 = vmatpush1.msra.mxu0 %v158
    %160 = vmatprep.subr.mxu0 0.0
    %v161 = vand.u32 %v64, 4294901760
    %162 = vmatpush1.msra.mxu0 %v161
    %163 = vmatprep.subr.mxu0 0.0
    %v164 = vand.u32 %v65, 4294901760
    %165 = vmatpush1.msra.mxu0 %v164
    %166 = vmatprep.subr.mxu0 0.0
    %v167 = vand.u32 %v66, 4294901760
    %168 = vmatpush1.msra.mxu0 %v167
    %169 = vmatprep.subr.mxu0 0.0
    %v170 = vand.u32 %v67, 4294901760
    %171 = vmatpush1.msra.mxu0 %v170
    %172 = vmatprep.subr.mxu0 0.0
    %v173 = vand.u32 %v68, 4294901760
    %174 = vmatpush1.msra.mxu0 %v173
    %175 = vmatprep.subr.mxu0 0.0
    %v176 = vand.u32 %v69, 4294901760
    %177 = vmatpush1.msra.mxu0 %v176
    %178 = vmatprep.subr.mxu0 0.0
    %v179 = vand.u32 %v70, 4294901760
    %180 = vmatpush1.msra.mxu0 %v179
    %181 = vmatprep.subr.mxu0 0.0
    %v182 = vand.u32 %v71, 4294901760
    %183 = vmatpush1.msra.mxu0 %v182
    %184 = vmatprep.subr.mxu0 0.0
    %v185 = vand.u32 %v72, 4294901760
    %186 = vmatpush1.msra.mxu0 %v185
    %187 = vmatprep.subr.mxu0 0.0
    %v188 = vand.u32 %v73, 4294901760
    %189 = vmatpush1.msra.mxu0 %v188
    %190 = vmatprep.subr.mxu0 0.0
    %v191 = vand.u32 %v74, 4294901760
    %192 = vmatpush1.msra.mxu0 %v191
    %193 = vmatprep.subr.mxu0 0.0
    %v194 = vand.u32 %v75, 4294901760
    %195 = vmatpush1.msra.mxu0 %v194
    %196 = vmatprep.subr.mxu0 0.0
    %v197 = vand.u32 %v76, 4294901760
    %198 = vmatpush1.msra.mxu0 %v197
    %199 = vmatprep.subr.mxu0 0.0
    %v200 = vand.u32 %v77, 4294901760
    %201 = vmatpush1.msra.mxu0 %v200
    %202 = vmatprep.subr.mxu0 0.0
    %v203 = vand.u32 %v78, 4294901760
    %204 = vmatpush1.msra.mxu0 %v203
    %205 = vmatprep.subr.mxu0 0.0
    %v206 = vand.u32 %v79, 4294901760
    %207 = vmatpush1.msra.mxu0 %v206
    %v208 = vand.u32 %v42, 4294901760
    %v209 = vsub.f32 %v42, %v208
    %v210 = vand.u32 %v209, 4294901760
    %v211 = vsub.f32 %v209, %v210
    %v212 = vand.u32 %v211, 4294901760
    %213 = vmatprep.mubr.f32.mxu0 %v212
    %214 = vmatmul.mubr.f32.gmra.mrb[0].mxu0 0.0
    %v215 = vpop.f32.mrb[0].mxu0
    %v216 = vadd.f32 0.0, %v215
    %v217 = vpop.f32.mrb[0].mxu0
    %v218 = vand.u32 %v43, 4294901760
    %v219 = vsub.f32 %v43, %v218
    %v220 = vand.u32 %v219, 4294901760
    %v221 = vsub.f32 %v219, %v220
    %v222 = vand.u32 %v221, 4294901760
    %223 = vmatprep.mubr.f32.mxu0 %v222
    %224 = vmatmul.mubr.f32.gmra.mrb[0].mxu0 0.0
    %v225 = vpop.f32.mrb[0].mxu0
    %v226 = vadd.f32 0.0, %v225
    %v227 = vpop.f32.mrb[0].mxu0
    %228 = vdwg.mxu0
    %229 = vmatprep.subr.mxu0 0.0
    %v230 = vand.u32 %v48, 4294901760
    %v231 = vsub.f32 %v48, %v230
    %v232 = vand.u32 %v231, 4294901760
    %v233 = vsub.f32 %v231, %v232
    %v234 = vand.u32 %v233, 4294901760
    %235 = vmatpush1.msra.mxu0 %v234
    %236 = vmatprep.subr.mxu0 0.0
    %v237 = vand.u32 %v49, 4294901760
    %v238 = vsub.f32 %v49, %v237
    %v239 = vand.u32 %v238, 4294901760
    %v240 = vsub.f32 %v238, %v239
    %v241 = vand.u32 %v240, 4294901760
    %242 = vmatpush1.msra.mxu0 %v241
    %243 = vmatprep.subr.mxu0 0.0
    %v244 = vand.u32 %v50, 4294901760
    %v245 = vsub.f32 %v50, %v244
    %v246 = vand.u32 %v245, 4294901760
    %v247 = vsub.f32 %v245, %v246
    %v248 = vand.u32 %v247, 4294901760
    %249 = vmatpush1.msra.mxu0 %v248
    %250 = vmatprep.subr.mxu0 0.0
    %v251 = vand.u32 %v51, 4294901760
    %v252 = vsub.f32 %v51, %v251
    %v253 = vand.u32 %v252, 4294901760
    %v254 = vsub.f32 %v252, %v253
    %v255 = vand.u32 %v254, 4294901760
    %256 = vmatpush1.msra.mxu0 %v255
    %257 = vmatprep.subr.mxu0 0.0
    %v258 = vand.u32 %v52, 4294901760
    %v259 = vsub.f32 %v52, %v258
    %v260 = vand.u32 %v259, 4294901760
    %v261 = vsub.f32 %v259, %v260
    %v262 = vand.u32 %v261, 4294901760
    %263 = vmatpush1.msra.mxu0 %v262
    %264 = vmatprep.subr.mxu0 0.0
    %v265 = vand.u32 %v53, 4294901760
    %v266 = vsub.f32 %v53, %v265
    %v267 = vand.u32 %v266, 4294901760
    %v268 = vsub.f32 %v266, %v267
    %v269 = vand.u32 %v268, 4294901760
    %270 = vmatpush1.msra.mxu0 %v269
    %271 = vmatprep.subr.mxu0 0.0
    %v272 = vand.u32 %v54, 4294901760
    %v273 = vsub.f32 %v54, %v272
    %v274 = vand.u32 %v273, 4294901760
    %v275 = vsub.f32 %v273, %v274
    %v276 = vand.u32 %v275, 4294901760
    %277 = vmatpush1.msra.mxu0 %v276
    %278 = vmatprep.subr.mxu0 0.0
    %v279 = vand.u32 %v55, 4294901760
    %v280 = vsub.f32 %v55, %v279
    %v281 = vand.u32 %v280, 4294901760
    %v282 = vsub.f32 %v280, %v281
    %v283 = vand.u32 %v282, 4294901760
    %284 = vmatpush1.msra.mxu0 %v283
    %285 = vmatprep.subr.mxu0 0.0
    %v286 = vand.u32 %v56, 4294901760
    %v287 = vsub.f32 %v56, %v286
    %v288 = vand.u32 %v287, 4294901760
    %v289 = vsub.f32 %v287, %v288
    %v290 = vand.u32 %v289, 4294901760
    %291 = vmatpush1.msra.mxu0 %v290
    %292 = vmatprep.subr.mxu0 0.0
    %v293 = vand.u32 %v57, 4294901760
    %v294 = vsub.f32 %v57, %v293
    %v295 = vand.u32 %v294, 4294901760
    %v296 = vsub.f32 %v294, %v295
    %v297 = vand.u32 %v296, 4294901760
    %298 = vmatpush1.msra.mxu0 %v297
    %299 = vmatprep.subr.mxu0 0.0
    %v300 = vand.u32 %v58, 4294901760
    %v301 = vsub.f32 %v58, %v300
    %v302 = vand.u32 %v301, 4294901760
    %v303 = vsub.f32 %v301, %v302
    %v304 = vand.u32 %v303, 4294901760
    %305 = vmatpush1.msra.mxu0 %v304
    %306 = vmatprep.subr.mxu0 0.0
    %v307 = vand.u32 %v59, 4294901760
    %v308 = vsub.f32 %v59, %v307
    %v309 = vand.u32 %v308, 4294901760
    %v310 = vsub.f32 %v308, %v309
    %v311 = vand.u32 %v310, 4294901760
    %312 = vmatpush1.msra.mxu0 %v311
    %313 = vmatprep.subr.mxu0 0.0
    %v314 = vand.u32 %v60, 4294901760
    %v315 = vsub.f32 %v60, %v314
    %v316 = vand.u32 %v315, 4294901760
    %v317 = vsub.f32 %v315, %v316
    %v318 = vand.u32 %v317, 4294901760
    %319 = vmatpush1.msra.mxu0 %v318
    %320 = vmatprep.subr.mxu0 0.0
    %v321 = vand.u32 %v61, 4294901760
    %v322 = vsub.f32 %v61, %v321
    %v323 = vand.u32 %v322, 4294901760
    %v324 = vsub.f32 %v322, %v323
    %v325 = vand.u32 %v324, 4294901760
    %326 = vmatpush1.msra.mxu0 %v325
    %327 = vmatprep.subr.mxu0 0.0
    %v328 = vand.u32 %v62, 4294901760
    %v329 = vsub.f32 %v62, %v328
    %v330 = vand.u32 %v329, 4294901760
    %v331 = vsub.f32 %v329, %v330
    %v332 = vand.u32 %v331, 4294901760
    %333 = vmatpush1.msra.mxu0 %v332
    %334 = vmatprep.subr.mxu0 0.0
    %v335 = vand.u32 %v63, 4294901760
    %v336 = vsub.f32 %v63, %v335
    %v337 = vand.u32 %v336, 4294901760
    %v338 = vsub.f32 %v336, %v337
    %v339 = vand.u32 %v338, 4294901760
    %340 = vmatpush1.msra.mxu0 %v339
    %341 = vmatprep.subr.mxu0 0.0
    %v342 = vand.u32 %v64, 4294901760
    %v343 = vsub.f32 %v64, %v342
    %v344 = vand.u32 %v343, 4294901760
    %v345 = vsub.f32 %v343, %v344
    %v346 = vand.u32 %v345, 4294901760
    %347 = vmatpush1.msra.mxu0 %v346
    %348 = vmatprep.subr.mxu0 0.0
    %v349 = vand.u32 %v65, 4294901760
    %v350 = vsub.f32 %v65, %v349
    %v351 = vand.u32 %v350, 4294901760
    %v352 = vsub.f32 %v350, %v351
    %v353 = vand.u32 %v352, 4294901760
    %354 = vmatpush1.msra.mxu0 %v353
    %355 = vmatprep.subr.mxu0 0.0
    %v356 = vand.u32 %v66, 4294901760
    %v357 = vsub.f32 %v66, %v356
    %v358 = vand.u32 %v357, 4294901760
    %v359 = vsub.f32 %v357, %v358
    %v360 = vand.u32 %v359, 4294901760
    %361 = vmatpush1.msra.mxu0 %v360
    %362 = vmatprep.subr.mxu0 0.0
    %v363 = vand.u32 %v67, 4294901760
    %v364 = vsub.f32 %v67, %v363
    %v365 = vand.u32 %v364, 4294901760
    %v366 = vsub.f32 %v364, %v365
    %v367 = vand.u32 %v366, 4294901760
    %368 = vmatpush1.msra.mxu0 %v367
    %369 = vmatprep.subr.mxu0 0.0
    %v370 = vand.u32 %v68, 4294901760
    %v371 = vsub.f32 %v68, %v370
    %v372 = vand.u32 %v371, 4294901760
    %v373 = vsub.f32 %v371, %v372
    %v374 = vand.u32 %v373, 4294901760
    %375 = vmatpush1.msra.mxu0 %v374
    %376 = vmatprep.subr.mxu0 0.0
    %v377 = vand.u32 %v69, 4294901760
    %v378 = vsub.f32 %v69, %v377
    %v379 = vand.u32 %v378, 4294901760
    %v380 = vsub.f32 %v378, %v379
    %v381 = vand.u32 %v380, 4294901760
    %382 = vmatpush1.msra.mxu0 %v381
    %383 = vmatprep.subr.mxu0 0.0
    %v384 = vand.u32 %v70, 4294901760
    %v385 = vsub.f32 %v70, %v384
    %v386 = vand.u32 %v385, 4294901760
    %v387 = vsub.f32 %v385, %v386
    %v388 = vand.u32 %v387, 4294901760
    %389 = vmatpush1.msra.mxu0 %v388
    %390 = vmatprep.subr.mxu0 0.0
    %v391 = vand.u32 %v71, 4294901760
    %v392 = vsub.f32 %v71, %v391
    %v393 = vand.u32 %v392, 4294901760
    %v394 = vsub.f32 %v392, %v393
    %v395 = vand.u32 %v394, 4294901760
    %396 = vmatpush1.msra.mxu0 %v395
    %397 = vmatprep.subr.mxu0 0.0
    %v398 = vand.u32 %v72, 4294901760
    %v399 = vsub.f32 %v72, %v398
    %v400 = vand.u32 %v399, 4294901760
    %v401 = vsub.f32 %v399, %v400
    %v402 = vand.u32 %v401, 4294901760
    %403 = vmatpush1.msra.mxu0 %v402
    %404 = vmatprep.subr.mxu0 0.0
    %v405 = vand.u32 %v73, 4294901760
    %v406 = vsub.f32 %v73, %v405
    %v407 = vand.u32 %v406, 4294901760
    %v408 = vsub.f32 %v406, %v407
    %v409 = vand.u32 %v408, 4294901760
    %410 = vmatpush1.msra.mxu0 %v409
    %411 = vmatprep.subr.mxu0 0.0
    %v412 = vand.u32 %v74, 4294901760
    %v413 = vsub.f32 %v74, %v412
    %v414 = vand.u32 %v413, 4294901760
    %v415 = vsub.f32 %v413, %v414
    %v416 = vand.u32 %v415, 4294901760
    %417 = vmatpush1.msra.mxu0 %v416
    %418 = vmatprep.subr.mxu0 0.0
    %v419 = vand.u32 %v75, 4294901760
    %v420 = vsub.f32 %v75, %v419
    %v421 = vand.u32 %v420, 4294901760
    %v422 = vsub.f32 %v420, %v421
    %v423 = vand.u32 %v422, 4294901760
    %424 = vmatpush1.msra.mxu0 %v423
    %425 = vmatprep.subr.mxu0 0.0
    %v426 = vand.u32 %v76, 4294901760
    %v427 = vsub.f32 %v76, %v426
    %v428 = vand.u32 %v427, 4294901760
    %v429 = vsub.f32 %v427, %v428
    %v430 = vand.u32 %v429, 4294901760
    %431 = vmatpush1.msra.mxu0 %v430
    %432 = vmatprep.subr.mxu0 0.0
    %v433 = vand.u32 %v77, 4294901760
    %v434 = vsub.f32 %v77, %v433
    %v435 = vand.u32 %v434, 4294901760
    %v436 = vsub.f32 %v434, %v435
    %v437 = vand.u32 %v436, 4294901760
    %438 = vmatpush1.msra.mxu0 %v437
    %439 = vmatprep.subr.mxu0 0.0
    %v440 = vand.u32 %v78, 4294901760
    %v441 = vsub.f32 %v78, %v440
    %v442 = vand.u32 %v441, 4294901760
    %v443 = vsub.f32 %v441, %v442
    %v444 = vand.u32 %v443, 4294901760
    %445 = vmatpush1.msra.mxu0 %v444
    %446 = vmatprep.subr.mxu0 0.0
    %v447 = vand.u32 %v79, 4294901760
    %v448 = vsub.f32 %v79, %v447
    %v449 = vand.u32 %v448, 4294901760
    %v450 = vsub.f32 %v448, %v449
    %v451 = vand.u32 %v450, 4294901760
    %452 = vmatpush1.msra.mxu0 %v451
    %v453 = vand.u32 %v42, 4294901760
    %454 = vmatprep.mubr.f32.mxu0 %v453
    %455 = vmatmul.mubr.f32.gmra.mrb[0].mxu0 1.0
    %v456 = vpop.f32.mrb[0].mxu0
    %v457 = vadd.f32 %v216, %v456
    %v458 = vpop.f32.mrb[0].mxu0
    %v459 = vand.u32 %v43, 4294901760
    %460 = vmatprep.mubr.f32.mxu0 %v459
    %461 = vmatmul.mubr.f32.gmra.mrb[0].mxu0 1.0
    %v462 = vpop.f32.mrb[0].mxu0
    %v463 = vadd.f32 %v226, %v462
    %v464 = vpop.f32.mrb[0].mxu0
    %465 = vdwg.mxu0
    %466 = vmatprep.subr.mxu0 0.0
    %v467 = vand.u32 %v48, 4294901760
    %v468 = vsub.f32 %v48, %v467
    %469 = vmatpush1.msra.mxu0 %v468
    %470 = vmatprep.subr.mxu0 0.0
    %v471 = vand.u32 %v49, 4294901760
    %v472 = vsub.f32 %v49, %v471
    %473 = vmatpush1.msra.mxu0 %v472
    %474 = vmatprep.subr.mxu0 0.0
    %v475 = vand.u32 %v50, 4294901760
    %v476 = vsub.f32 %v50, %v475
    %477 = vmatpush1.msra.mxu0 %v476
    %478 = vmatprep.subr.mxu0 0.0
    %v479 = vand.u32 %v51, 4294901760
    %v480 = vsub.f32 %v51, %v479
    %481 = vmatpush1.msra.mxu0 %v480
    %482 = vmatprep.subr.mxu0 0.0
    %v483 = vand.u32 %v52, 4294901760
    %v484 = vsub.f32 %v52, %v483
    %485 = vmatpush1.msra.mxu0 %v484
    %486 = vmatprep.subr.mxu0 0.0
    %v487 = vand.u32 %v53, 4294901760
    %v488 = vsub.f32 %v53, %v487
    %489 = vmatpush1.msra.mxu0 %v488
    %490 = vmatprep.subr.mxu0 0.0
    %v491 = vand.u32 %v54, 4294901760
    %v492 = vsub.f32 %v54, %v491
    %493 = vmatpush1.msra.mxu0 %v492
    %494 = vmatprep.subr.mxu0 0.0
    %v495 = vand.u32 %v55, 4294901760
    %v496 = vsub.f32 %v55, %v495
    %497 = vmatpush1.msra.mxu0 %v496
    %498 = vmatprep.subr.mxu0 0.0
    %v499 = vand.u32 %v56, 4294901760
    %v500 = vsub.f32 %v56, %v499
    %501 = vmatpush1.msra.mxu0 %v500
    %502 = vmatprep.subr.mxu0 0.0
    %v503 = vand.u32 %v57, 4294901760
    %v504 = vsub.f32 %v57, %v503
    %505 = vmatpush1.msra.mxu0 %v504
    %506 = vmatprep.subr.mxu0 0.0
    %v507 = vand.u32 %v58, 4294901760
    %v508 = vsub.f32 %v58, %v507
    %509 = vmatpush1.msra.mxu0 %v508
    %510 = vmatprep.subr.mxu0 0.0
    %v511 = vand.u32 %v59, 4294901760
    %v512 = vsub.f32 %v59, %v511
    %513 = vmatpush1.msra.mxu0 %v512
    %514 = vmatprep.subr.mxu0 0.0
    %v515 = vand.u32 %v60, 4294901760
    %v516 = vsub.f32 %v60, %v515
    %517 = vmatpush1.msra.mxu0 %v516
    %518 = vmatprep.subr.mxu0 0.0
    %v519 = vand.u32 %v61, 4294901760
    %v520 = vsub.f32 %v61, %v519
    %521 = vmatpush1.msra.mxu0 %v520
    %522 = vmatprep.subr.mxu0 0.0
    %v523 = vand.u32 %v62, 4294901760
    %v524 = vsub.f32 %v62, %v523
    %525 = vmatpush1.msra.mxu0 %v524
    %526 = vmatprep.subr.mxu0 0.0
    %v527 = vand.u32 %v63, 4294901760
    %v528 = vsub.f32 %v63, %v527
    %529 = vmatpush1.msra.mxu0 %v528
    %530 = vmatprep.subr.mxu0 0.0
    %v531 = vand.u32 %v64, 4294901760
    %v532 = vsub.f32 %v64, %v531
    %533 = vmatpush1.msra.mxu0 %v532
    %534 = vmatprep.subr.mxu0 0.0
    %v535 = vand.u32 %v65, 4294901760
    %v536 = vsub.f32 %v65, %v535
    %537 = vmatpush1.msra.mxu0 %v536
    %538 = vmatprep.subr.mxu0 0.0
    %v539 = vand.u32 %v66, 4294901760
    %v540 = vsub.f32 %v66, %v539
    %541 = vmatpush1.msra.mxu0 %v540
    %542 = vmatprep.subr.mxu0 0.0
    %v543 = vand.u32 %v67, 4294901760
    %v544 = vsub.f32 %v67, %v543
    %545 = vmatpush1.msra.mxu0 %v544
    %546 = vmatprep.subr.mxu0 0.0
    %v547 = vand.u32 %v68, 4294901760
    %v548 = vsub.f32 %v68, %v547
    %549 = vmatpush1.msra.mxu0 %v548
    %550 = vmatprep.subr.mxu0 0.0
    %v551 = vand.u32 %v69, 4294901760
    %v552 = vsub.f32 %v69, %v551
    %553 = vmatpush1.msra.mxu0 %v552
    %554 = vmatprep.subr.mxu0 0.0
    %v555 = vand.u32 %v70, 4294901760
    %v556 = vsub.f32 %v70, %v555
    %557 = vmatpush1.msra.mxu0 %v556
    %558 = vmatprep.subr.mxu0 0.0
    %v559 = vand.u32 %v71, 4294901760
    %v560 = vsub.f32 %v71, %v559
    %561 = vmatpush1.msra.mxu0 %v560
    %562 = vmatprep.subr.mxu0 0.0
    %v563 = vand.u32 %v72, 4294901760
    %v564 = vsub.f32 %v72, %v563
    %565 = vmatpush1.msra.mxu0 %v564
    %566 = vmatprep.subr.mxu0 0.0
    %v567 = vand.u32 %v73, 4294901760
    %v568 = vsub.f32 %v73, %v567
    %569 = vmatpush1.msra.mxu0 %v568
    %570 = vmatprep.subr.mxu0 0.0
    %v571 = vand.u32 %v74, 4294901760
    %v572 = vsub.f32 %v74, %v571
    %573 = vmatpush1.msra.mxu0 %v572
    %574 = vmatprep.subr.mxu0 0.0
    %v575 = vand.u32 %v75, 4294901760
    %v576 = vsub.f32 %v75, %v575
    %577 = vmatpush1.msra.mxu0 %v576
    %578 = vmatprep.subr.mxu0 0.0
    %v579 = vand.u32 %v76, 4294901760
    %v580 = vsub.f32 %v76, %v579
    %581 = vmatpush1.msra.mxu0 %v580
    %582 = vmatprep.subr.mxu0 0.0
    %v583 = vand.u32 %v77, 4294901760
    %v584 = vsub.f32 %v77, %v583
    %585 = vmatpush1.msra.mxu0 %v584
    %586 = vmatprep.subr.mxu0 0.0
    %v587 = vand.u32 %v78, 4294901760
    %v588 = vsub.f32 %v78, %v587
    %589 = vmatpush1.msra.mxu0 %v588
    %590 = vmatprep.subr.mxu0 0.0
    %v591 = vand.u32 %v79, 4294901760
    %v592 = vsub.f32 %v79, %v591
    %593 = vmatpush1.msra.mxu0 %v592
    %v594 = vand.u32 %v42, 4294901760
    %v595 = vsub.f32 %v42, %v594
    %596 = vmatprep.mubr.f32.mxu0 %v595
    %597 = vmatmul.mubr.f32.gmra.mrb[0].mxu0 0.0
    %v598 = vpop.f32.mrb[0].mxu0
    %v599 = vadd.f32 %v457, %v598
    %v600 = vpop.f32.mrb[0].mxu0
    %v601 = vand.u32 %v43, 4294901760
    %v602 = vsub.f32 %v43, %v601
    %603 = vmatprep.mubr.f32.mxu0 %v602
    %604 = vmatmul.mubr.f32.gmra.mrb[0].mxu0 0.0
    %v605 = vpop.f32.mrb[0].mxu0
    %v606 = vadd.f32 %v463, %v605
    %v607 = vpop.f32.mrb[0].mxu0
    %608 = vdwg.mxu0
    %609 = vmatprep.subr.mxu0 0.0
    %v610 = vand.u32 %v48, 4294901760
    %611 = vmatpush1.msra.mxu0 %v610
    %612 = vmatprep.subr.mxu0 0.0
    %v613 = vand.u32 %v49, 4294901760
    %614 = vmatpush1.msra.mxu0 %v613
    %615 = vmatprep.subr.mxu0 0.0
    %v616 = vand.u32 %v50, 4294901760
    %617 = vmatpush1.msra.mxu0 %v616
    %618 = vmatprep.subr.mxu0 0.0
    %v619 = vand.u32 %v51, 4294901760
    %620 = vmatpush1.msra.mxu0 %v619
    %621 = vmatprep.subr.mxu0 0.0
    %v622 = vand.u32 %v52, 4294901760
    %623 = vmatpush1.msra.mxu0 %v622
    %624 = vmatprep.subr.mxu0 0.0
    %v625 = vand.u32 %v53, 4294901760
    %626 = vmatpush1.msra.mxu0 %v625
    %627 = vmatprep.subr.mxu0 0.0
    %v628 = vand.u32 %v54, 4294901760
    %629 = vmatpush1.msra.mxu0 %v628
    %630 = vmatprep.subr.mxu0 0.0
    %v631 = vand.u32 %v55, 4294901760
    %632 = vmatpush1.msra.mxu0 %v631
    %633 = vmatprep.subr.mxu0 0.0
    %v634 = vand.u32 %v56, 4294901760
    %635 = vmatpush1.msra.mxu0 %v634
    %636 = vmatprep.subr.mxu0 0.0
    %v637 = vand.u32 %v57, 4294901760
    %638 = vmatpush1.msra.mxu0 %v637
    %639 = vmatprep.subr.mxu0 0.0
    %v640 = vand.u32 %v58, 4294901760
    %641 = vmatpush1.msra.mxu0 %v640
    %642 = vmatprep.subr.mxu0 0.0
    %v643 = vand.u32 %v59, 4294901760
    %644 = vmatpush1.msra.mxu0 %v643
    %645 = vmatprep.subr.mxu0 0.0
    %v646 = vand.u32 %v60, 4294901760
    %647 = vmatpush1.msra.mxu0 %v646
    %648 = vmatprep.subr.mxu0 0.0
    %v649 = vand.u32 %v61, 4294901760
    %650 = vmatpush1.msra.mxu0 %v649
    %651 = vmatprep.subr.mxu0 0.0
    %v652 = vand.u32 %v62, 4294901760
    %653 = vmatpush1.msra.mxu0 %v652
    %654 = vmatprep.subr.mxu0 0.0
    %v655 = vand.u32 %v63, 4294901760
    %656 = vmatpush1.msra.mxu0 %v655
    %657 = vmatprep.subr.mxu0 0.0
    %v658 = vand.u32 %v64, 4294901760
    %659 = vmatpush1.msra.mxu0 %v658
    %660 = vmatprep.subr.mxu0 0.0
    %v661 = vand.u32 %v65, 4294901760
    %662 = vmatpush1.msra.mxu0 %v661
    %663 = vmatprep.subr.mxu0 0.0
    %v664 = vand.u32 %v66, 4294901760
    %665 = vmatpush1.msra.mxu0 %v664
    %666 = vmatprep.subr.mxu0 0.0
    %v667 = vand.u32 %v67, 4294901760
    %668 = vmatpush1.msra.mxu0 %v667
    %669 = vmatprep.subr.mxu0 0.0
    %v670 = vand.u32 %v68, 4294901760
    %671 = vmatpush1.msra.mxu0 %v670
    %672 = vmatprep.subr.mxu0 0.0
    %v673 = vand.u32 %v69, 4294901760
    %674 = vmatpush1.msra.mxu0 %v673
    %675 = vmatprep.subr.mxu0 0.0
    %v676 = vand.u32 %v70, 4294901760
    %677 = vmatpush1.msra.mxu0 %v676
    %678 = vmatprep.subr.mxu0 0.0
    %v679 = vand.u32 %v71, 4294901760
    %680 = vmatpush1.msra.mxu0 %v679
    %681 = vmatprep.subr.mxu0 0.0
    %v682 = vand.u32 %v72, 4294901760
    %683 = vmatpush1.msra.mxu0 %v682
    %684 = vmatprep.subr.mxu0 0.0
    %v685 = vand.u32 %v73, 4294901760
    %686 = vmatpush1.msra.mxu0 %v685
    %687 = vmatprep.subr.mxu0 0.0
    %v688 = vand.u32 %v74, 4294901760
    %689 = vmatpush1.msra.mxu0 %v688
    %690 = vmatprep.subr.mxu0 0.0
    %v691 = vand.u32 %v75, 4294901760
    %692 = vmatpush1.msra.mxu0 %v691
    %693 = vmatprep.subr.mxu0 0.0
    %v694 = vand.u32 %v76, 4294901760
    %695 = vmatpush1.msra.mxu0 %v694
    %696 = vmatprep.subr.mxu0 0.0
    %v697 = vand.u32 %v77, 4294901760
    %698 = vmatpush1.msra.mxu0 %v697
    %699 = vmatprep.subr.mxu0 0.0
    %v700 = vand.u32 %v78, 4294901760
    %701 = vmatpush1.msra.mxu0 %v700
    %702 = vmatprep.subr.mxu0 0.0
    %v703 = vand.u32 %v79, 4294901760
    %704 = vmatpush1.msra.mxu0 %v703
    %v705 = vand.u32 %v42, 4294901760
    %v706 = vsub.f32 %v42, %v705
    %v707 = vand.u32 %v706, 4294901760
    %708 = vmatprep.mubr.f32.mxu0 %v707
    %709 = vmatmul.mubr.f32.gmra.mrb[0].mxu0 0.0
    %v710 = vpop.f32.mrb[0].mxu0
    %v711 = vadd.f32 %v599, %v710
    %v712 = vpop.f32.mrb[0].mxu0
    %v713 = vand.u32 %v43, 4294901760
    %v714 = vsub.f32 %v43, %v713
    %v715 = vand.u32 %v714, 4294901760
    %716 = vmatprep.mubr.f32.mxu0 %v715
    %717 = vmatmul.mubr.f32.gmra.mrb[0].mxu0 0.0
    %v718 = vpop.f32.mrb[0].mxu0
    %v719 = vadd.f32 %v606, %v718
    %v720 = vpop.f32.mrb[0].mxu0
    %721 = vdwg.mxu0
    %722 = vmatprep.subr.mxu0 0.0
    %v723 = vand.u32 %v48, 4294901760
    %v724 = vsub.f32 %v48, %v723
    %v725 = vand.u32 %v724, 4294901760
    %726 = vmatpush1.msra.mxu0 %v725
    %727 = vmatprep.subr.mxu0 0.0
    %v728 = vand.u32 %v49, 4294901760
    %v729 = vsub.f32 %v49, %v728
    %v730 = vand.u32 %v729, 4294901760
    %731 = vmatpush1.msra.mxu0 %v730
    %732 = vmatprep.subr.mxu0 0.0
    %v733 = vand.u32 %v50, 4294901760
    %v734 = vsub.f32 %v50, %v733
    %v735 = vand.u32 %v734, 4294901760
    %736 = vmatpush1.msra.mxu0 %v735
    %737 = vmatprep.subr.mxu0 0.0
    %v738 = vand.u32 %v51, 4294901760
    %v739 = vsub.f32 %v51, %v738
    %v740 = vand.u32 %v739, 4294901760
    %741 = vmatpush1.msra.mxu0 %v740
    %742 = vmatprep.subr.mxu0 0.0
    %v743 = vand.u32 %v52, 4294901760
    %v744 = vsub.f32 %v52, %v743
    %v745 = vand.u32 %v744, 4294901760
    %746 = vmatpush1.msra.mxu0 %v745
    %747 = vmatprep.subr.mxu0 0.0
    %v748 = vand.u32 %v53, 4294901760
    %v749 = vsub.f32 %v53, %v748
    %v750 = vand.u32 %v749, 4294901760
    %751 = vmatpush1.msra.mxu0 %v750
    %752 = vmatprep.subr.mxu0 0.0
    %v753 = vand.u32 %v54, 4294901760
    %v754 = vsub.f32 %v54, %v753
    %v755 = vand.u32 %v754, 4294901760
    %756 = vmatpush1.msra.mxu0 %v755
    %757 = vmatprep.subr.mxu0 0.0
    %v758 = vand.u32 %v55, 4294901760
    %v759 = vsub.f32 %v55, %v758
    %v760 = vand.u32 %v759, 4294901760
    %761 = vmatpush1.msra.mxu0 %v760
    %762 = vmatprep.subr.mxu0 0.0
    %v763 = vand.u32 %v56, 4294901760
    %v764 = vsub.f32 %v56, %v763
    %v765 = vand.u32 %v764, 4294901760
    %766 = vmatpush1.msra.mxu0 %v765
    %767 = vmatprep.subr.mxu0 0.0
    %v768 = vand.u32 %v57, 4294901760
    %v769 = vsub.f32 %v57, %v768
    %v770 = vand.u32 %v769, 4294901760
    %771 = vmatpush1.msra.mxu0 %v770
    %772 = vmatprep.subr.mxu0 0.0
    %v773 = vand.u32 %v58, 4294901760
    %v774 = vsub.f32 %v58, %v773
    %v775 = vand.u32 %v774, 4294901760
    %776 = vmatpush1.msra.mxu0 %v775
    %777 = vmatprep.subr.mxu0 0.0
    %v778 = vand.u32 %v59, 4294901760
    %v779 = vsub.f32 %v59, %v778
    %v780 = vand.u32 %v779, 4294901760
    %781 = vmatpush1.msra.mxu0 %v780
    %782 = vmatprep.subr.mxu0 0.0
    %v783 = vand.u32 %v60, 4294901760
    %v784 = vsub.f32 %v60, %v783
    %v785 = vand.u32 %v784, 4294901760
    %786 = vmatpush1.msra.mxu0 %v785
    %787 = vmatprep.subr.mxu0 0.0
    %v788 = vand.u32 %v61, 4294901760
    %v789 = vsub.f32 %v61, %v788
    %v790 = vand.u32 %v789, 4294901760
    %791 = vmatpush1.msra.mxu0 %v790
    %792 = vmatprep.subr.mxu0 0.0
    %v793 = vand.u32 %v62, 4294901760
    %v794 = vsub.f32 %v62, %v793
    %v795 = vand.u32 %v794, 4294901760
    %796 = vmatpush1.msra.mxu0 %v795
    %797 = vmatprep.subr.mxu0 0.0
    %v798 = vand.u32 %v63, 4294901760
    %v799 = vsub.f32 %v63, %v798
    %v800 = vand.u32 %v799, 4294901760
    %801 = vmatpush1.msra.mxu0 %v800
    %802 = vmatprep.subr.mxu0 0.0
    %v803 = vand.u32 %v64, 4294901760
    %v804 = vsub.f32 %v64, %v803
    %v805 = vand.u32 %v804, 4294901760
    %806 = vmatpush1.msra.mxu0 %v805
    %807 = vmatprep.subr.mxu0 0.0
    %v808 = vand.u32 %v65, 4294901760
    %v809 = vsub.f32 %v65, %v808
    %v810 = vand.u32 %v809, 4294901760
    %811 = vmatpush1.msra.mxu0 %v810
    %812 = vmatprep.subr.mxu0 0.0
    %v813 = vand.u32 %v66, 4294901760
    %v814 = vsub.f32 %v66, %v813
    %v815 = vand.u32 %v814, 4294901760
    %816 = vmatpush1.msra.mxu0 %v815
    %817 = vmatprep.subr.mxu0 0.0
    %v818 = vand.u32 %v67, 4294901760
    %v819 = vsub.f32 %v67, %v818
    %v820 = vand.u32 %v819, 4294901760
    %821 = vmatpush1.msra.mxu0 %v820
    %822 = vmatprep.subr.mxu0 0.0
    %v823 = vand.u32 %v68, 4294901760
    %v824 = vsub.f32 %v68, %v823
    %v825 = vand.u32 %v824, 4294901760
    %826 = vmatpush1.msra.mxu0 %v825
    %827 = vmatprep.subr.mxu0 0.0
    %v828 = vand.u32 %v69, 4294901760
    %v829 = vsub.f32 %v69, %v828
    %v830 = vand.u32 %v829, 4294901760
    %831 = vmatpush1.msra.mxu0 %v830
    %832 = vmatprep.subr.mxu0 0.0
    %v833 = vand.u32 %v70, 4294901760
    %v834 = vsub.f32 %v70, %v833
    %v835 = vand.u32 %v834, 4294901760
    %836 = vmatpush1.msra.mxu0 %v835
    %837 = vmatprep.subr.mxu0 0.0
    %v838 = vand.u32 %v71, 4294901760
    %v839 = vsub.f32 %v71, %v838
    %v840 = vand.u32 %v839, 4294901760
    %841 = vmatpush1.msra.mxu0 %v840
    %842 = vmatprep.subr.mxu0 0.0
    %v843 = vand.u32 %v72, 4294901760
    %v844 = vsub.f32 %v72, %v843
    %v845 = vand.u32 %v844, 4294901760
    %846 = vmatpush1.msra.mxu0 %v845
    %847 = vmatprep.subr.mxu0 0.0
    %v848 = vand.u32 %v73, 4294901760
    %v849 = vsub.f32 %v73, %v848
    %v850 = vand.u32 %v849, 4294901760
    %851 = vmatpush1.msra.mxu0 %v850
    %852 = vmatprep.subr.mxu0 0.0
    %v853 = vand.u32 %v74, 4294901760
    %v854 = vsub.f32 %v74, %v853
    %v855 = vand.u32 %v854, 4294901760
    %856 = vmatpush1.msra.mxu0 %v855
    %857 = vmatprep.subr.mxu0 0.0
    %v858 = vand.u32 %v75, 4294901760
    %v859 = vsub.f32 %v75, %v858
    %v860 = vand.u32 %v859, 4294901760
    %861 = vmatpush1.msra.mxu0 %v860
    %862 = vmatprep.subr.mxu0 0.0
    %v863 = vand.u32 %v76, 4294901760
    %v864 = vsub.f32 %v76, %v863
    %v865 = vand.u32 %v864, 4294901760
    %866 = vmatpush1.msra.mxu0 %v865
    %867 = vmatprep.subr.mxu0 0.0
    %v868 = vand.u32 %v77, 4294901760
    %v869 = vsub.f32 %v77, %v868
    %v870 = vand.u32 %v869, 4294901760
    %871 = vmatpush1.msra.mxu0 %v870
    %872 = vmatprep.subr.mxu0 0.0
    %v873 = vand.u32 %v78, 4294901760
    %v874 = vsub.f32 %v78, %v873
    %v875 = vand.u32 %v874, 4294901760
    %876 = vmatpush1.msra.mxu0 %v875
    %877 = vmatprep.subr.mxu0 0.0
    %v878 = vand.u32 %v79, 4294901760
    %v879 = vsub.f32 %v79, %v878
    %v880 = vand.u32 %v879, 4294901760
    %881 = vmatpush1.msra.mxu0 %v880
    %v882 = vand.u32 %v42, 4294901760
    %883 = vmatprep.mubr.f32.mxu0 %v882
    %884 = vmatmul.mubr.f32.gmra.mrb[0].mxu0 1.0
    %v885 = vpop.f32.mrb[0].mxu0
    %v886 = vadd.f32 %v711, %v885
    %v887 = vpop.f32.mrb[0].mxu0
    %v888 = vand.u32 %v43, 4294901760
    %889 = vmatprep.mubr.f32.mxu0 %v888
    %890 = vmatmul.mubr.f32.gmra.mrb[0].mxu0 1.0
    %v891 = vpop.f32.mrb[0].mxu0
    %v892 = vadd.f32 %v719, %v891
    %v893 = vpop.f32.mrb[0].mxu0
    %894 = vdwg.mxu0
    %895 = vmatprep.subr.mxu0 0.0
    %v896 = vand.u32 %v48, 4294901760
    %897 = vmatpush1.msra.mxu0 %v896
    %898 = vmatprep.subr.mxu0 0.0
    %v899 = vand.u32 %v49, 4294901760
    %900 = vmatpush1.msra.mxu0 %v899
    %901 = vmatprep.subr.mxu0 0.0
    %v902 = vand.u32 %v50, 4294901760
    %903 = vmatpush1.msra.mxu0 %v902
    %904 = vmatprep.subr.mxu0 0.0
    %v905 = vand.u32 %v51, 4294901760
    %906 = vmatpush1.msra.mxu0 %v905
    %907 = vmatprep.subr.mxu0 0.0
    %v908 = vand.u32 %v52, 4294901760
    %909 = vmatpush1.msra.mxu0 %v908
    %910 = vmatprep.subr.mxu0 0.0
    %v911 = vand.u32 %v53, 4294901760
    %912 = vmatpush1.msra.mxu0 %v911
    %913 = vmatprep.subr.mxu0 0.0
    %v914 = vand.u32 %v54, 4294901760
    %915 = vmatpush1.msra.mxu0 %v914
    %916 = vmatprep.subr.mxu0 0.0
    %v917 = vand.u32 %v55, 4294901760
    %918 = vmatpush1.msra.mxu0 %v917
    %919 = vmatprep.subr.mxu0 0.0
    %v920 = vand.u32 %v56, 4294901760
    %921 = vmatpush1.msra.mxu0 %v920
    %922 = vmatprep.subr.mxu0 0.0
    %v923 = vand.u32 %v57, 4294901760
    %924 = vmatpush1.msra.mxu0 %v923
    %925 = vmatprep.subr.mxu0 0.0
    %v926 = vand.u32 %v58, 4294901760
    %927 = vmatpush1.msra.mxu0 %v926
    %928 = vmatprep.subr.mxu0 0.0
    %v929 = vand.u32 %v59, 4294901760
    %930 = vmatpush1.msra.mxu0 %v929
    %931 = vmatprep.subr.mxu0 0.0
    %v932 = vand.u32 %v60, 4294901760
    %933 = vmatpush1.msra.mxu0 %v932
    %934 = vmatprep.subr.mxu0 0.0
    %v935 = vand.u32 %v61, 4294901760
    %936 = vmatpush1.msra.mxu0 %v935
    %937 = vmatprep.subr.mxu0 0.0
    %v938 = vand.u32 %v62, 4294901760
    %939 = vmatpush1.msra.mxu0 %v938
    %940 = vmatprep.subr.mxu0 0.0
    %v941 = vand.u32 %v63, 4294901760
    %942 = vmatpush1.msra.mxu0 %v941
    %943 = vmatprep.subr.mxu0 0.0
    %v944 = vand.u32 %v64, 4294901760
    %945 = vmatpush1.msra.mxu0 %v944
    %946 = vmatprep.subr.mxu0 0.0
    %v947 = vand.u32 %v65, 4294901760
    %948 = vmatpush1.msra.mxu0 %v947
    %949 = vmatprep.subr.mxu0 0.0
    %v950 = vand.u32 %v66, 4294901760
    %951 = vmatpush1.msra.mxu0 %v950
    %952 = vmatprep.subr.mxu0 0.0
    %v953 = vand.u32 %v67, 4294901760
    %954 = vmatpush1.msra.mxu0 %v953
    %955 = vmatprep.subr.mxu0 0.0
    %v956 = vand.u32 %v68, 4294901760
    %957 = vmatpush1.msra.mxu0 %v956
    %958 = vmatprep.subr.mxu0 0.0
    %v959 = vand.u32 %v69, 4294901760
    %960 = vmatpush1.msra.mxu0 %v959
    %961 = vmatprep.subr.mxu0 0.0
    %v962 = vand.u32 %v70, 4294901760
    %963 = vmatpush1.msra.mxu0 %v962
    %964 = vmatprep.subr.mxu0 0.0
    %v965 = vand.u32 %v71, 4294901760
    %966 = vmatpush1.msra.mxu0 %v965
    %967 = vmatprep.subr.mxu0 0.0
    %v968 = vand.u32 %v72, 4294901760
    %969 = vmatpush1.msra.mxu0 %v968
    %970 = vmatprep.subr.mxu0 0.0
    %v971 = vand.u32 %v73, 4294901760
    %972 = vmatpush1.msra.mxu0 %v971
    %973 = vmatprep.subr.mxu0 0.0
    %v974 = vand.u32 %v74, 4294901760
    %975 = vmatpush1.msra.mxu0 %v974
    %976 = vmatprep.subr.mxu0 0.0
    %v977 = vand.u32 %v75, 4294901760
    %978 = vmatpush1.msra.mxu0 %v977
    %979 = vmatprep.subr.mxu0 0.0
    %v980 = vand.u32 %v76, 4294901760
    %981 = vmatpush1.msra.mxu0 %v980
    %982 = vmatprep.subr.mxu0 0.0
    %v983 = vand.u32 %v77, 4294901760
    %984 = vmatpush1.msra.mxu0 %v983
    %985 = vmatprep.subr.mxu0 0.0
    %v986 = vand.u32 %v78, 4294901760
    %987 = vmatpush1.msra.mxu0 %v986
    %988 = vmatprep.subr.mxu0 0.0
    %v989 = vand.u32 %v79, 4294901760
    %990 = vmatpush1.msra.mxu0 %v989
    %v991 = vand.u32 %v42, 4294901760
    %992 = vmatprep.mubr.f32.mxu0 %v991
    %993 = vmatmul.mubr.f32.gmra.mrb[0].mxu0 1.0
    %v994 = vpop.f32.mrb[0].mxu0
    %v995 = vadd.f32 %v886, %v994
    %v996 = vpop.f32.mrb[0].mxu0
    %v997 = vand.u32 %v43, 4294901760
    %998 = vmatprep.mubr.f32.mxu0 %v997
    %999 = vmatmul.mubr.f32.gmra.mrb[0].mxu0 1.0
    %v1000 = vpop.f32.mrb[0].mxu0
    %v1001 = vadd.f32 %v892, %v1000
    %v1002 = vpop.f32.mrb[0].mxu0
    %1003 = vdwg.mxu0
    %1004 = vmatprep.subr.mxu0 0.0
    %v1005 = vand.u32 %v80, 4294901760
    %1006 = vmatpush1.msra.mxu0 %v1005
    %1007 = vmatprep.subr.mxu0 0.0
    %v1008 = vand.u32 %v81, 4294901760
    %1009 = vmatpush1.msra.mxu0 %v1008
    %1010 = vmatprep.subr.mxu0 0.0
    %v1011 = vand.u32 %v82, 4294901760
    %1012 = vmatpush1.msra.mxu0 %v1011
    %1013 = vmatprep.subr.mxu0 0.0
    %v1014 = vand.u32 %v83, 4294901760
    %1015 = vmatpush1.msra.mxu0 %v1014
    %1016 = vmatprep.subr.mxu0 0.0
    %v1017 = vand.u32 %v84, 4294901760
    %1018 = vmatpush1.msra.mxu0 %v1017
    %1019 = vmatprep.subr.mxu0 0.0
    %v1020 = vand.u32 %v85, 4294901760
    %1021 = vmatpush1.msra.mxu0 %v1020
    %1022 = vmatprep.subr.mxu0 0.0
    %v1023 = vand.u32 %v86, 4294901760
    %1024 = vmatpush1.msra.mxu0 %v1023
    %1025 = vmatprep.subr.mxu0 0.0
    %v1026 = vand.u32 %v87, 4294901760
    %1027 = vmatpush1.msra.mxu0 %v1026
    %1028 = vmatprep.subr.mxu0 0.0
    %v1029 = vand.u32 %v88, 4294901760
    %1030 = vmatpush1.msra.mxu0 %v1029
    %1031 = vmatprep.subr.mxu0 0.0
    %v1032 = vand.u32 %v89, 4294901760
    %1033 = vmatpush1.msra.mxu0 %v1032
    %1034 = vmatprep.subr.mxu0 0.0
    %v1035 = vand.u32 %v90, 4294901760
    %1036 = vmatpush1.msra.mxu0 %v1035
    %1037 = vmatprep.subr.mxu0 0.0
    %v1038 = vand.u32 %v91, 4294901760
    %1039 = vmatpush1.msra.mxu0 %v1038
    %1040 = vmatprep.subr.mxu0 0.0
    %v1041 = vand.u32 %v92, 4294901760
    %1042 = vmatpush1.msra.mxu0 %v1041
    %1043 = vmatprep.subr.mxu0 0.0
    %v1044 = vand.u32 %v93, 4294901760
    %1045 = vmatpush1.msra.mxu0 %v1044
    %1046 = vmatprep.subr.mxu0 0.0
    %v1047 = vand.u32 %v94, 4294901760
    %1048 = vmatpush1.msra.mxu0 %v1047
    %1049 = vmatprep.subr.mxu0 0.0
    %v1050 = vand.u32 %v95, 4294901760
    %1051 = vmatpush1.msra.mxu0 %v1050
    %1052 = vmatprep.subr.mxu0 0.0
    %v1053 = vand.u32 %v96, 4294901760
    %1054 = vmatpush1.msra.mxu0 %v1053
    %1055 = vmatprep.subr.mxu0 0.0
    %v1056 = vand.u32 %v97, 4294901760
    %1057 = vmatpush1.msra.mxu0 %v1056
    %1058 = vmatprep.subr.mxu0 0.0
    %v1059 = vand.u32 %v98, 4294901760
    %1060 = vmatpush1.msra.mxu0 %v1059
    %1061 = vmatprep.subr.mxu0 0.0
    %v1062 = vand.u32 %v99, 4294901760
    %1063 = vmatpush1.msra.mxu0 %v1062
    %1064 = vmatprep.subr.mxu0 0.0
    %v1065 = vand.u32 %v100, 4294901760
    %1066 = vmatpush1.msra.mxu0 %v1065
    %1067 = vmatprep.subr.mxu0 0.0
    %v1068 = vand.u32 %v101, 4294901760
    %1069 = vmatpush1.msra.mxu0 %v1068
    %1070 = vmatprep.subr.mxu0 0.0
    %v1071 = vand.u32 %v102, 4294901760
    %1072 = vmatpush1.msra.mxu0 %v1071
    %1073 = vmatprep.subr.mxu0 0.0
    %v1074 = vand.u32 %v103, 4294901760
    %1075 = vmatpush1.msra.mxu0 %v1074
    %1076 = vmatprep.subr.mxu0 0.0
    %v1077 = vand.u32 %v104, 4294901760
    %1078 = vmatpush1.msra.mxu0 %v1077
    %1079 = vmatprep.subr.mxu0 0.0
    %v1080 = vand.u32 %v105, 4294901760
    %1081 = vmatpush1.msra.mxu0 %v1080
    %1082 = vmatprep.subr.mxu0 0.0
    %v1083 = vand.u32 %v106, 4294901760
    %1084 = vmatpush1.msra.mxu0 %v1083
    %1085 = vmatprep.subr.mxu0 0.0
    %v1086 = vand.u32 %v107, 4294901760
    %1087 = vmatpush1.msra.mxu0 %v1086
    %1088 = vmatprep.subr.mxu0 0.0
    %v1089 = vand.u32 %v108, 4294901760
    %1090 = vmatpush1.msra.mxu0 %v1089
    %1091 = vmatprep.subr.mxu0 0.0
    %v1092 = vand.u32 %v109, 4294901760
    %1093 = vmatpush1.msra.mxu0 %v1092
    %1094 = vmatprep.subr.mxu0 0.0
    %v1095 = vand.u32 %v110, 4294901760
    %1096 = vmatpush1.msra.mxu0 %v1095
    %1097 = vmatprep.subr.mxu0 0.0
    %v1098 = vand.u32 %v111, 4294901760
    %1099 = vmatpush1.msra.mxu0 %v1098
    %v1100 = vand.u32 %v46, 4294901760
    %v1101 = vsub.f32 %v46, %v1100
    %v1102 = vand.u32 %v1101, 4294901760
    %v1103 = vsub.f32 %v1101, %v1102
    %v1104 = vand.u32 %v1103, 4294901760
    %1105 = vmatprep.mubr.f32.mxu0 %v1104
    %v1106 = vand.u32 %v44, 4294901760
    %v1107 = vsub.f32 %v44, %v1106
    %v1108 = vand.u32 %v1107, 4294901760
    %v1109 = vsub.f32 %v1107, %v1108
    %v1110 = vand.u32 %v1109, 4294901760
    %1111 = vmatmul.mubr.f32.gmra.mrb[0].mxu0 %v1110
    %v1112 = vpop.f32.mrb[0].mxu0
    %v1113 = vadd.f32 %v995, %v1112
    %v1114 = vpop.f32.mrb[0].mxu0
    %v1115 = vand.u32 %v47, 4294901760
    %v1116 = vsub.f32 %v47, %v1115
    %v1117 = vand.u32 %v1116, 4294901760
    %v1118 = vsub.f32 %v1116, %v1117
    %v1119 = vand.u32 %v1118, 4294901760
    %1120 = vmatprep.mubr.f32.mxu0 %v1119
    %v1121 = vand.u32 %v45, 4294901760
    %v1122 = vsub.f32 %v45, %v1121
    %v1123 = vand.u32 %v1122, 4294901760
    %v1124 = vsub.f32 %v1122, %v1123
    %v1125 = vand.u32 %v1124, 4294901760
    %1126 = vmatmul.mubr.f32.gmra.mrb[0].mxu0 %v1125
    %v1127 = vpop.f32.mrb[0].mxu0
    %v1128 = vadd.f32 %v1001, %v1127
    %v1129 = vpop.f32.mrb[0].mxu0
    %1130 = vdwg.mxu0
    %1131 = vmatprep.subr.mxu0 0.0
    %v1132 = vand.u32 %v80, 4294901760
    %v1133 = vsub.f32 %v80, %v1132
    %v1134 = vand.u32 %v1133, 4294901760
    %v1135 = vsub.f32 %v1133, %v1134
    %v1136 = vand.u32 %v1135, 4294901760
    %1137 = vmatpush1.msra.mxu0 %v1136
    %1138 = vmatprep.subr.mxu0 0.0
    %v1139 = vand.u32 %v81, 4294901760
    %v1140 = vsub.f32 %v81, %v1139
    %v1141 = vand.u32 %v1140, 4294901760
    %v1142 = vsub.f32 %v1140, %v1141
    %v1143 = vand.u32 %v1142, 4294901760
    %1144 = vmatpush1.msra.mxu0 %v1143
    %1145 = vmatprep.subr.mxu0 0.0
    %v1146 = vand.u32 %v82, 4294901760
    %v1147 = vsub.f32 %v82, %v1146
    %v1148 = vand.u32 %v1147, 4294901760
    %v1149 = vsub.f32 %v1147, %v1148
    %v1150 = vand.u32 %v1149, 4294901760
    %1151 = vmatpush1.msra.mxu0 %v1150
    %1152 = vmatprep.subr.mxu0 0.0
    %v1153 = vand.u32 %v83, 4294901760
    %v1154 = vsub.f32 %v83, %v1153
    %v1155 = vand.u32 %v1154, 4294901760
    %v1156 = vsub.f32 %v1154, %v1155
    %v1157 = vand.u32 %v1156, 4294901760
    %1158 = vmatpush1.msra.mxu0 %v1157
    %1159 = vmatprep.subr.mxu0 0.0
    %v1160 = vand.u32 %v84, 4294901760
    %v1161 = vsub.f32 %v84, %v1160
    %v1162 = vand.u32 %v1161, 4294901760
    %v1163 = vsub.f32 %v1161, %v1162
    %v1164 = vand.u32 %v1163, 4294901760
    %1165 = vmatpush1.msra.mxu0 %v1164
    %1166 = vmatprep.subr.mxu0 0.0
    %v1167 = vand.u32 %v85, 4294901760
    %v1168 = vsub.f32 %v85, %v1167
    %v1169 = vand.u32 %v1168, 4294901760
    %v1170 = vsub.f32 %v1168, %v1169
    %v1171 = vand.u32 %v1170, 4294901760
    %1172 = vmatpush1.msra.mxu0 %v1171
    %1173 = vmatprep.subr.mxu0 0.0
    %v1174 = vand.u32 %v86, 4294901760
    %v1175 = vsub.f32 %v86, %v1174
    %v1176 = vand.u32 %v1175, 4294901760
    %v1177 = vsub.f32 %v1175, %v1176
    %v1178 = vand.u32 %v1177, 4294901760
    %1179 = vmatpush1.msra.mxu0 %v1178
    %1180 = vmatprep.subr.mxu0 0.0
    %v1181 = vand.u32 %v87, 4294901760
    %v1182 = vsub.f32 %v87, %v1181
    %v1183 = vand.u32 %v1182, 4294901760
    %v1184 = vsub.f32 %v1182, %v1183
    %v1185 = vand.u32 %v1184, 4294901760
    %1186 = vmatpush1.msra.mxu0 %v1185
    %1187 = vmatprep.subr.mxu0 0.0
    %v1188 = vand.u32 %v88, 4294901760
    %v1189 = vsub.f32 %v88, %v1188
    %v1190 = vand.u32 %v1189, 4294901760
    %v1191 = vsub.f32 %v1189, %v1190
    %v1192 = vand.u32 %v1191, 4294901760
    %1193 = vmatpush1.msra.mxu0 %v1192
    %1194 = vmatprep.subr.mxu0 0.0
    %v1195 = vand.u32 %v89, 4294901760
    %v1196 = vsub.f32 %v89, %v1195
    %v1197 = vand.u32 %v1196, 4294901760
    %v1198 = vsub.f32 %v1196, %v1197
    %v1199 = vand.u32 %v1198, 4294901760
    %1200 = vmatpush1.msra.mxu0 %v1199
    %1201 = vmatprep.subr.mxu0 0.0
    %v1202 = vand.u32 %v90, 4294901760
    %v1203 = vsub.f32 %v90, %v1202
    %v1204 = vand.u32 %v1203, 4294901760
    %v1205 = vsub.f32 %v1203, %v1204
    %v1206 = vand.u32 %v1205, 4294901760
    %1207 = vmatpush1.msra.mxu0 %v1206
    %1208 = vmatprep.subr.mxu0 0.0
    %v1209 = vand.u32 %v91, 4294901760
    %v1210 = vsub.f32 %v91, %v1209
    %v1211 = vand.u32 %v1210, 4294901760
    %v1212 = vsub.f32 %v1210, %v1211
    %v1213 = vand.u32 %v1212, 4294901760
    %1214 = vmatpush1.msra.mxu0 %v1213
    %1215 = vmatprep.subr.mxu0 0.0
    %v1216 = vand.u32 %v92, 4294901760
    %v1217 = vsub.f32 %v92, %v1216
    %v1218 = vand.u32 %v1217, 4294901760
    %v1219 = vsub.f32 %v1217, %v1218
    %v1220 = vand.u32 %v1219, 4294901760
    %1221 = vmatpush1.msra.mxu0 %v1220
    %1222 = vmatprep.subr.mxu0 0.0
    %v1223 = vand.u32 %v93, 4294901760
    %v1224 = vsub.f32 %v93, %v1223
    %v1225 = vand.u32 %v1224, 4294901760
    %v1226 = vsub.f32 %v1224, %v1225
    %v1227 = vand.u32 %v1226, 4294901760
    %1228 = vmatpush1.msra.mxu0 %v1227
    %1229 = vmatprep.subr.mxu0 0.0
    %v1230 = vand.u32 %v94, 4294901760
    %v1231 = vsub.f32 %v94, %v1230
    %v1232 = vand.u32 %v1231, 4294901760
    %v1233 = vsub.f32 %v1231, %v1232
    %v1234 = vand.u32 %v1233, 4294901760
    %1235 = vmatpush1.msra.mxu0 %v1234
    %1236 = vmatprep.subr.mxu0 0.0
    %v1237 = vand.u32 %v95, 4294901760
    %v1238 = vsub.f32 %v95, %v1237
    %v1239 = vand.u32 %v1238, 4294901760
    %v1240 = vsub.f32 %v1238, %v1239
    %v1241 = vand.u32 %v1240, 4294901760
    %1242 = vmatpush1.msra.mxu0 %v1241
    %1243 = vmatprep.subr.mxu0 0.0
    %v1244 = vand.u32 %v96, 4294901760
    %v1245 = vsub.f32 %v96, %v1244
    %v1246 = vand.u32 %v1245, 4294901760
    %v1247 = vsub.f32 %v1245, %v1246
    %v1248 = vand.u32 %v1247, 4294901760
    %1249 = vmatpush1.msra.mxu0 %v1248
    %1250 = vmatprep.subr.mxu0 0.0
    %v1251 = vand.u32 %v97, 4294901760
    %v1252 = vsub.f32 %v97, %v1251
    %v1253 = vand.u32 %v1252, 4294901760
    %v1254 = vsub.f32 %v1252, %v1253
    %v1255 = vand.u32 %v1254, 4294901760
    %1256 = vmatpush1.msra.mxu0 %v1255
    %1257 = vmatprep.subr.mxu0 0.0
    %v1258 = vand.u32 %v98, 4294901760
    %v1259 = vsub.f32 %v98, %v1258
    %v1260 = vand.u32 %v1259, 4294901760
    %v1261 = vsub.f32 %v1259, %v1260
    %v1262 = vand.u32 %v1261, 4294901760
    %1263 = vmatpush1.msra.mxu0 %v1262
    %1264 = vmatprep.subr.mxu0 0.0
    %v1265 = vand.u32 %v99, 4294901760
    %v1266 = vsub.f32 %v99, %v1265
    %v1267 = vand.u32 %v1266, 4294901760
    %v1268 = vsub.f32 %v1266, %v1267
    %v1269 = vand.u32 %v1268, 4294901760
    %1270 = vmatpush1.msra.mxu0 %v1269
    %1271 = vmatprep.subr.mxu0 0.0
    %v1272 = vand.u32 %v100, 4294901760
    %v1273 = vsub.f32 %v100, %v1272
    %v1274 = vand.u32 %v1273, 4294901760
    %v1275 = vsub.f32 %v1273, %v1274
    %v1276 = vand.u32 %v1275, 4294901760
    %1277 = vmatpush1.msra.mxu0 %v1276
    %1278 = vmatprep.subr.mxu0 0.0
    %v1279 = vand.u32 %v101, 4294901760
    %v1280 = vsub.f32 %v101, %v1279
    %v1281 = vand.u32 %v1280, 4294901760
    %v1282 = vsub.f32 %v1280, %v1281
    %v1283 = vand.u32 %v1282, 4294901760
    %1284 = vmatpush1.msra.mxu0 %v1283
    %1285 = vmatprep.subr.mxu0 0.0
    %v1286 = vand.u32 %v102, 4294901760
    %v1287 = vsub.f32 %v102, %v1286
    %v1288 = vand.u32 %v1287, 4294901760
    %v1289 = vsub.f32 %v1287, %v1288
    %v1290 = vand.u32 %v1289, 4294901760
    %1291 = vmatpush1.msra.mxu0 %v1290
    %1292 = vmatprep.subr.mxu0 0.0
    %v1293 = vand.u32 %v103, 4294901760
    %v1294 = vsub.f32 %v103, %v1293
    %v1295 = vand.u32 %v1294, 4294901760
    %v1296 = vsub.f32 %v1294, %v1295
    %v1297 = vand.u32 %v1296, 4294901760
    %1298 = vmatpush1.msra.mxu0 %v1297
    %1299 = vmatprep.subr.mxu0 0.0
    %v1300 = vand.u32 %v104, 4294901760
    %v1301 = vsub.f32 %v104, %v1300
    %v1302 = vand.u32 %v1301, 4294901760
    %v1303 = vsub.f32 %v1301, %v1302
    %v1304 = vand.u32 %v1303, 4294901760
    %1305 = vmatpush1.msra.mxu0 %v1304
    %1306 = vmatprep.subr.mxu0 0.0
    %v1307 = vand.u32 %v105, 4294901760
    %v1308 = vsub.f32 %v105, %v1307
    %v1309 = vand.u32 %v1308, 4294901760
    %v1310 = vsub.f32 %v1308, %v1309
    %v1311 = vand.u32 %v1310, 4294901760
    %1312 = vmatpush1.msra.mxu0 %v1311
    %1313 = vmatprep.subr.mxu0 0.0
    %v1314 = vand.u32 %v106, 4294901760
    %v1315 = vsub.f32 %v106, %v1314
    %v1316 = vand.u32 %v1315, 4294901760
    %v1317 = vsub.f32 %v1315, %v1316
    %v1318 = vand.u32 %v1317, 4294901760
    %1319 = vmatpush1.msra.mxu0 %v1318
    %1320 = vmatprep.subr.mxu0 0.0
    %v1321 = vand.u32 %v107, 4294901760
    %v1322 = vsub.f32 %v107, %v1321
    %v1323 = vand.u32 %v1322, 4294901760
    %v1324 = vsub.f32 %v1322, %v1323
    %v1325 = vand.u32 %v1324, 4294901760
    %1326 = vmatpush1.msra.mxu0 %v1325
    %1327 = vmatprep.subr.mxu0 0.0
    %v1328 = vand.u32 %v108, 4294901760
    %v1329 = vsub.f32 %v108, %v1328
    %v1330 = vand.u32 %v1329, 4294901760
    %v1331 = vsub.f32 %v1329, %v1330
    %v1332 = vand.u32 %v1331, 4294901760
    %1333 = vmatpush1.msra.mxu0 %v1332
    %1334 = vmatprep.subr.mxu0 0.0
    %v1335 = vand.u32 %v109, 4294901760
    %v1336 = vsub.f32 %v109, %v1335
    %v1337 = vand.u32 %v1336, 4294901760
    %v1338 = vsub.f32 %v1336, %v1337
    %v1339 = vand.u32 %v1338, 4294901760
    %1340 = vmatpush1.msra.mxu0 %v1339
    %1341 = vmatprep.subr.mxu0 0.0
    %v1342 = vand.u32 %v110, 4294901760
    %v1343 = vsub.f32 %v110, %v1342
    %v1344 = vand.u32 %v1343, 4294901760
    %v1345 = vsub.f32 %v1343, %v1344
    %v1346 = vand.u32 %v1345, 4294901760
    %1347 = vmatpush1.msra.mxu0 %v1346
    %1348 = vmatprep.subr.mxu0 0.0
    %v1349 = vand.u32 %v111, 4294901760
    %v1350 = vsub.f32 %v111, %v1349
    %v1351 = vand.u32 %v1350, 4294901760
    %v1352 = vsub.f32 %v1350, %v1351
    %v1353 = vand.u32 %v1352, 4294901760
    %1354 = vmatpush1.msra.mxu0 %v1353
    %v1355 = vand.u32 %v46, 4294901760
    %1356 = vmatprep.mubr.f32.mxu0 %v1355
    %v1357 = vand.u32 %v44, 4294901760
    %1358 = vmatmul.mubr.f32.gmra.mrb[0].mxu0 %v1357
    %v1359 = vpop.f32.mrb[0].mxu0
    %v1360 = vadd.f32 %v1113, %v1359
    %v1361 = vpop.f32.mrb[0].mxu0
    %v1362 = vand.u32 %v47, 4294901760
    %1363 = vmatprep.mubr.f32.mxu0 %v1362
    %v1364 = vand.u32 %v45, 4294901760
    %1365 = vmatmul.mubr.f32.gmra.mrb[0].mxu0 %v1364
    %v1366 = vpop.f32.mrb[0].mxu0
    %v1367 = vadd.f32 %v1128, %v1366
    %v1368 = vpop.f32.mrb[0].mxu0
    %1369 = vdwg.mxu0
    %1370 = vmatprep.subr.mxu0 0.0
    %v1371 = vand.u32 %v80, 4294901760
    %v1372 = vsub.f32 %v80, %v1371
    %1373 = vmatpush1.msra.mxu0 %v1372
    %1374 = vmatprep.subr.mxu0 0.0
    %v1375 = vand.u32 %v81, 4294901760
    %v1376 = vsub.f32 %v81, %v1375
    %1377 = vmatpush1.msra.mxu0 %v1376
    %1378 = vmatprep.subr.mxu0 0.0
    %v1379 = vand.u32 %v82, 4294901760
    %v1380 = vsub.f32 %v82, %v1379
    %1381 = vmatpush1.msra.mxu0 %v1380
    %1382 = vmatprep.subr.mxu0 0.0
    %v1383 = vand.u32 %v83, 4294901760
    %v1384 = vsub.f32 %v83, %v1383
    %1385 = vmatpush1.msra.mxu0 %v1384
    %1386 = vmatprep.subr.mxu0 0.0
    %v1387 = vand.u32 %v84, 4294901760
    %v1388 = vsub.f32 %v84, %v1387
    %1389 = vmatpush1.msra.mxu0 %v1388
    %1390 = vmatprep.subr.mxu0 0.0
    %v1391 = vand.u32 %v85, 4294901760
    %v1392 = vsub.f32 %v85, %v1391
    %1393 = vmatpush1.msra.mxu0 %v1392
    %1394 = vmatprep.subr.mxu0 0.0
    %v1395 = vand.u32 %v86, 4294901760
    %v1396 = vsub.f32 %v86, %v1395
    %1397 = vmatpush1.msra.mxu0 %v1396
    %1398 = vmatprep.subr.mxu0 0.0
    %v1399 = vand.u32 %v87, 4294901760
    %v1400 = vsub.f32 %v87, %v1399
    %1401 = vmatpush1.msra.mxu0 %v1400
    %1402 = vmatprep.subr.mxu0 0.0
    %v1403 = vand.u32 %v88, 4294901760
    %v1404 = vsub.f32 %v88, %v1403
    %1405 = vmatpush1.msra.mxu0 %v1404
    %1406 = vmatprep.subr.mxu0 0.0
    %v1407 = vand.u32 %v89, 4294901760
    %v1408 = vsub.f32 %v89, %v1407
    %1409 = vmatpush1.msra.mxu0 %v1408
    %1410 = vmatprep.subr.mxu0 0.0
    %v1411 = vand.u32 %v90, 4294901760
    %v1412 = vsub.f32 %v90, %v1411
    %1413 = vmatpush1.msra.mxu0 %v1412
    %1414 = vmatprep.subr.mxu0 0.0
    %v1415 = vand.u32 %v91, 4294901760
    %v1416 = vsub.f32 %v91, %v1415
    %1417 = vmatpush1.msra.mxu0 %v1416
    %1418 = vmatprep.subr.mxu0 0.0
    %v1419 = vand.u32 %v92, 4294901760
    %v1420 = vsub.f32 %v92, %v1419
    %1421 = vmatpush1.msra.mxu0 %v1420
    %1422 = vmatprep.subr.mxu0 0.0
    %v1423 = vand.u32 %v93, 4294901760
    %v1424 = vsub.f32 %v93, %v1423
    %1425 = vmatpush1.msra.mxu0 %v1424
    %1426 = vmatprep.subr.mxu0 0.0
    %v1427 = vand.u32 %v94, 4294901760
    %v1428 = vsub.f32 %v94, %v1427
    %1429 = vmatpush1.msra.mxu0 %v1428
    %1430 = vmatprep.subr.mxu0 0.0
    %v1431 = vand.u32 %v95, 4294901760
    %v1432 = vsub.f32 %v95, %v1431
    %1433 = vmatpush1.msra.mxu0 %v1432
    %1434 = vmatprep.subr.mxu0 0.0
    %v1435 = vand.u32 %v96, 4294901760
    %v1436 = vsub.f32 %v96, %v1435
    %1437 = vmatpush1.msra.mxu0 %v1436
    %1438 = vmatprep.subr.mxu0 0.0
    %v1439 = vand.u32 %v97, 4294901760
    %v1440 = vsub.f32 %v97, %v1439
    %1441 = vmatpush1.msra.mxu0 %v1440
    %1442 = vmatprep.subr.mxu0 0.0
    %v1443 = vand.u32 %v98, 4294901760
    %v1444 = vsub.f32 %v98, %v1443
    %1445 = vmatpush1.msra.mxu0 %v1444
    %1446 = vmatprep.subr.mxu0 0.0
    %v1447 = vand.u32 %v99, 4294901760
    %v1448 = vsub.f32 %v99, %v1447
    %1449 = vmatpush1.msra.mxu0 %v1448
    %1450 = vmatprep.subr.mxu0 0.0
    %v1451 = vand.u32 %v100, 4294901760
    %v1452 = vsub.f32 %v100, %v1451
    %1453 = vmatpush1.msra.mxu0 %v1452
    %1454 = vmatprep.subr.mxu0 0.0
    %v1455 = vand.u32 %v101, 4294901760
    %v1456 = vsub.f32 %v101, %v1455
    %1457 = vmatpush1.msra.mxu0 %v1456
    %1458 = vmatprep.subr.mxu0 0.0
    %v1459 = vand.u32 %v102, 4294901760
    %v1460 = vsub.f32 %v102, %v1459
    %1461 = vmatpush1.msra.mxu0 %v1460
    %1462 = vmatprep.subr.mxu0 0.0
    %v1463 = vand.u32 %v103, 4294901760
    %v1464 = vsub.f32 %v103, %v1463
    %1465 = vmatpush1.msra.mxu0 %v1464
    %1466 = vmatprep.subr.mxu0 0.0
    %v1467 = vand.u32 %v104, 4294901760
    %v1468 = vsub.f32 %v104, %v1467
    %1469 = vmatpush1.msra.mxu0 %v1468
    %1470 = vmatprep.subr.mxu0 0.0
    %v1471 = vand.u32 %v105, 4294901760
    %v1472 = vsub.f32 %v105, %v1471
    %1473 = vmatpush1.msra.mxu0 %v1472
    %1474 = vmatprep.subr.mxu0 0.0
    %v1475 = vand.u32 %v106, 4294901760
    %v1476 = vsub.f32 %v106, %v1475
    %1477 = vmatpush1.msra.mxu0 %v1476
    %1478 = vmatprep.subr.mxu0 0.0
    %v1479 = vand.u32 %v107, 4294901760
    %v1480 = vsub.f32 %v107, %v1479
    %1481 = vmatpush1.msra.mxu0 %v1480
    %1482 = vmatprep.subr.mxu0 0.0
    %v1483 = vand.u32 %v108, 4294901760
    %v1484 = vsub.f32 %v108, %v1483
    %1485 = vmatpush1.msra.mxu0 %v1484
    %1486 = vmatprep.subr.mxu0 0.0
    %v1487 = vand.u32 %v109, 4294901760
    %v1488 = vsub.f32 %v109, %v1487
    %1489 = vmatpush1.msra.mxu0 %v1488
    %1490 = vmatprep.subr.mxu0 0.0
    %v1491 = vand.u32 %v110, 4294901760
    %v1492 = vsub.f32 %v110, %v1491
    %1493 = vmatpush1.msra.mxu0 %v1492
    %1494 = vmatprep.subr.mxu0 0.0
    %v1495 = vand.u32 %v111, 4294901760
    %v1496 = vsub.f32 %v111, %v1495
    %1497 = vmatpush1.msra.mxu0 %v1496
    %v1498 = vand.u32 %v46, 4294901760
    %v1499 = vsub.f32 %v46, %v1498
    %1500 = vmatprep.mubr.f32.mxu0 %v1499
    %v1501 = vand.u32 %v44, 4294901760
    %v1502 = vsub.f32 %v44, %v1501
    %1503 = vmatmul.mubr.f32.gmra.mrb[0].mxu0 %v1502
    %v1504 = vpop.f32.mrb[0].mxu0
    %v1505 = vadd.f32 %v1360, %v1504
    %v1506 = vpop.f32.mrb[0].mxu0
    %v1507 = vand.u32 %v47, 4294901760
    %v1508 = vsub.f32 %v47, %v1507
    %1509 = vmatprep.mubr.f32.mxu0 %v1508
    %v1510 = vand.u32 %v45, 4294901760
    %v1511 = vsub.f32 %v45, %v1510
    %1512 = vmatmul.mubr.f32.gmra.mrb[0].mxu0 %v1511
    %v1513 = vpop.f32.mrb[0].mxu0
    %v1514 = vadd.f32 %v1367, %v1513
    %v1515 = vpop.f32.mrb[0].mxu0
    %1516 = vdwg.mxu0
    %1517 = vmatprep.subr.mxu0 0.0
    %v1518 = vand.u32 %v80, 4294901760
    %1519 = vmatpush1.msra.mxu0 %v1518
    %1520 = vmatprep.subr.mxu0 0.0
    %v1521 = vand.u32 %v81, 4294901760
    %1522 = vmatpush1.msra.mxu0 %v1521
    %1523 = vmatprep.subr.mxu0 0.0
    %v1524 = vand.u32 %v82, 4294901760
    %1525 = vmatpush1.msra.mxu0 %v1524
    %1526 = vmatprep.subr.mxu0 0.0
    %v1527 = vand.u32 %v83, 4294901760
    %1528 = vmatpush1.msra.mxu0 %v1527
    %1529 = vmatprep.subr.mxu0 0.0
    %v1530 = vand.u32 %v84, 4294901760
    %1531 = vmatpush1.msra.mxu0 %v1530
    %1532 = vmatprep.subr.mxu0 0.0
    %v1533 = vand.u32 %v85, 4294901760
    %1534 = vmatpush1.msra.mxu0 %v1533
    %1535 = vmatprep.subr.mxu0 0.0
    %v1536 = vand.u32 %v86, 4294901760
    %1537 = vmatpush1.msra.mxu0 %v1536
    %1538 = vmatprep.subr.mxu0 0.0
    %v1539 = vand.u32 %v87, 4294901760
    %1540 = vmatpush1.msra.mxu0 %v1539
    %1541 = vmatprep.subr.mxu0 0.0
    %v1542 = vand.u32 %v88, 4294901760
    %1543 = vmatpush1.msra.mxu0 %v1542
    %1544 = vmatprep.subr.mxu0 0.0
    %v1545 = vand.u32 %v89, 4294901760
    %1546 = vmatpush1.msra.mxu0 %v1545
    %1547 = vmatprep.subr.mxu0 0.0
    %v1548 = vand.u32 %v90, 4294901760
    %1549 = vmatpush1.msra.mxu0 %v1548
    %1550 = vmatprep.subr.mxu0 0.0
    %v1551 = vand.u32 %v91, 4294901760
    %1552 = vmatpush1.msra.mxu0 %v1551
    %1553 = vmatprep.subr.mxu0 0.0
    %v1554 = vand.u32 %v92, 4294901760
    %1555 = vmatpush1.msra.mxu0 %v1554
    %1556 = vmatprep.subr.mxu0 0.0
    %v1557 = vand.u32 %v93, 4294901760
    %1558 = vmatpush1.msra.mxu0 %v1557
    %1559 = vmatprep.subr.mxu0 0.0
    %v1560 = vand.u32 %v94, 4294901760
    %1561 = vmatpush1.msra.mxu0 %v1560
    %1562 = vmatprep.subr.mxu0 0.0
    %v1563 = vand.u32 %v95, 4294901760
    %1564 = vmatpush1.msra.mxu0 %v1563
    %1565 = vmatprep.subr.mxu0 0.0
    %v1566 = vand.u32 %v96, 4294901760
    %1567 = vmatpush1.msra.mxu0 %v1566
    %1568 = vmatprep.subr.mxu0 0.0
    %v1569 = vand.u32 %v97, 4294901760
    %1570 = vmatpush1.msra.mxu0 %v1569
    %1571 = vmatprep.subr.mxu0 0.0
    %v1572 = vand.u32 %v98, 4294901760
    %1573 = vmatpush1.msra.mxu0 %v1572
    %1574 = vmatprep.subr.mxu0 0.0
    %v1575 = vand.u32 %v99, 4294901760
    %1576 = vmatpush1.msra.mxu0 %v1575
    %1577 = vmatprep.subr.mxu0 0.0
    %v1578 = vand.u32 %v100, 4294901760
    %1579 = vmatpush1.msra.mxu0 %v1578
    %1580 = vmatprep.subr.mxu0 0.0
    %v1581 = vand.u32 %v101, 4294901760
    %1582 = vmatpush1.msra.mxu0 %v1581
    %1583 = vmatprep.subr.mxu0 0.0
    %v1584 = vand.u32 %v102, 4294901760
    %1585 = vmatpush1.msra.mxu0 %v1584
    %1586 = vmatprep.subr.mxu0 0.0
    %v1587 = vand.u32 %v103, 4294901760
    %1588 = vmatpush1.msra.mxu0 %v1587
    %1589 = vmatprep.subr.mxu0 0.0
    %v1590 = vand.u32 %v104, 4294901760
    %1591 = vmatpush1.msra.mxu0 %v1590
    %1592 = vmatprep.subr.mxu0 0.0
    %v1593 = vand.u32 %v105, 4294901760
    %1594 = vmatpush1.msra.mxu0 %v1593
    %1595 = vmatprep.subr.mxu0 0.0
    %v1596 = vand.u32 %v106, 4294901760
    %1597 = vmatpush1.msra.mxu0 %v1596
    %1598 = vmatprep.subr.mxu0 0.0
    %v1599 = vand.u32 %v107, 4294901760
    %1600 = vmatpush1.msra.mxu0 %v1599
    %1601 = vmatprep.subr.mxu0 0.0
    %v1602 = vand.u32 %v108, 4294901760
    %1603 = vmatpush1.msra.mxu0 %v1602
    %1604 = vmatprep.subr.mxu0 0.0
    %v1605 = vand.u32 %v109, 4294901760
    %1606 = vmatpush1.msra.mxu0 %v1605
    %1607 = vmatprep.subr.mxu0 0.0
    %v1608 = vand.u32 %v110, 4294901760
    %1609 = vmatpush1.msra.mxu0 %v1608
    %1610 = vmatprep.subr.mxu0 0.0
    %v1611 = vand.u32 %v111, 4294901760
    %1612 = vmatpush1.msra.mxu0 %v1611
    %v1613 = vand.u32 %v46, 4294901760
    %v1614 = vsub.f32 %v46, %v1613
    %v1615 = vand.u32 %v1614, 4294901760
    %1616 = vmatprep.mubr.f32.mxu0 %v1615
    %v1617 = vand.u32 %v44, 4294901760
    %v1618 = vsub.f32 %v44, %v1617
    %v1619 = vand.u32 %v1618, 4294901760
    %1620 = vmatmul.mubr.f32.gmra.mrb[0].mxu0 %v1619
    %v1621 = vpop.f32.mrb[0].mxu0
    %v1622 = vadd.f32 %v1505, %v1621
    %v1623 = vpop.f32.mrb[0].mxu0
    %v1624 = vand.u32 %v47, 4294901760
    %v1625 = vsub.f32 %v47, %v1624
    %v1626 = vand.u32 %v1625, 4294901760
    %1627 = vmatprep.mubr.f32.mxu0 %v1626
    %v1628 = vand.u32 %v45, 4294901760
    %v1629 = vsub.f32 %v45, %v1628
    %v1630 = vand.u32 %v1629, 4294901760
    %1631 = vmatmul.mubr.f32.gmra.mrb[0].mxu0 %v1630
    %v1632 = vpop.f32.mrb[0].mxu0
    %v1633 = vadd.f32 %v1514, %v1632
    %v1634 = vpop.f32.mrb[0].mxu0
    %1635 = vdwg.mxu0
    %1636 = vmatprep.subr.mxu0 0.0
    %v1637 = vand.u32 %v80, 4294901760
    %v1638 = vsub.f32 %v80, %v1637
    %v1639 = vand.u32 %v1638, 4294901760
    %1640 = vmatpush1.msra.mxu0 %v1639
    %1641 = vmatprep.subr.mxu0 0.0
    %v1642 = vand.u32 %v81, 4294901760
    %v1643 = vsub.f32 %v81, %v1642
    %v1644 = vand.u32 %v1643, 4294901760
    %1645 = vmatpush1.msra.mxu0 %v1644
    %1646 = vmatprep.subr.mxu0 0.0
    %v1647 = vand.u32 %v82, 4294901760
    %v1648 = vsub.f32 %v82, %v1647
    %v1649 = vand.u32 %v1648, 4294901760
    %1650 = vmatpush1.msra.mxu0 %v1649
    %1651 = vmatprep.subr.mxu0 0.0
    %v1652 = vand.u32 %v83, 4294901760
    %v1653 = vsub.f32 %v83, %v1652
    %v1654 = vand.u32 %v1653, 4294901760
    %1655 = vmatpush1.msra.mxu0 %v1654
    %1656 = vmatprep.subr.mxu0 0.0
    %v1657 = vand.u32 %v84, 4294901760
    %v1658 = vsub.f32 %v84, %v1657
    %v1659 = vand.u32 %v1658, 4294901760
    %1660 = vmatpush1.msra.mxu0 %v1659
    %1661 = vmatprep.subr.mxu0 0.0
    %v1662 = vand.u32 %v85, 4294901760
    %v1663 = vsub.f32 %v85, %v1662
    %v1664 = vand.u32 %v1663, 4294901760
    %1665 = vmatpush1.msra.mxu0 %v1664
    %1666 = vmatprep.subr.mxu0 0.0
    %v1667 = vand.u32 %v86, 4294901760
    %v1668 = vsub.f32 %v86, %v1667
    %v1669 = vand.u32 %v1668, 4294901760
    %1670 = vmatpush1.msra.mxu0 %v1669
    %1671 = vmatprep.subr.mxu0 0.0
    %v1672 = vand.u32 %v87, 4294901760
    %v1673 = vsub.f32 %v87, %v1672
    %v1674 = vand.u32 %v1673, 4294901760
    %1675 = vmatpush1.msra.mxu0 %v1674
    %1676 = vmatprep.subr.mxu0 0.0
    %v1677 = vand.u32 %v88, 4294901760
    %v1678 = vsub.f32 %v88, %v1677
    %v1679 = vand.u32 %v1678, 4294901760
    %1680 = vmatpush1.msra.mxu0 %v1679
    %1681 = vmatprep.subr.mxu0 0.0
    %v1682 = vand.u32 %v89, 4294901760
    %v1683 = vsub.f32 %v89, %v1682
    %v1684 = vand.u32 %v1683, 4294901760
    %1685 = vmatpush1.msra.mxu0 %v1684
    %1686 = vmatprep.subr.mxu0 0.0
    %v1687 = vand.u32 %v90, 4294901760
    %v1688 = vsub.f32 %v90, %v1687
    %v1689 = vand.u32 %v1688, 4294901760
    %1690 = vmatpush1.msra.mxu0 %v1689
    %1691 = vmatprep.subr.mxu0 0.0
    %v1692 = vand.u32 %v91, 4294901760
    %v1693 = vsub.f32 %v91, %v1692
    %v1694 = vand.u32 %v1693, 4294901760
    %1695 = vmatpush1.msra.mxu0 %v1694
    %1696 = vmatprep.subr.mxu0 0.0
    %v1697 = vand.u32 %v92, 4294901760
    %v1698 = vsub.f32 %v92, %v1697
    %v1699 = vand.u32 %v1698, 4294901760
    %1700 = vmatpush1.msra.mxu0 %v1699
    %1701 = vmatprep.subr.mxu0 0.0
    %v1702 = vand.u32 %v93, 4294901760
    %v1703 = vsub.f32 %v93, %v1702
    %v1704 = vand.u32 %v1703, 4294901760
    %1705 = vmatpush1.msra.mxu0 %v1704
    %1706 = vmatprep.subr.mxu0 0.0
    %v1707 = vand.u32 %v94, 4294901760
    %v1708 = vsub.f32 %v94, %v1707
    %v1709 = vand.u32 %v1708, 4294901760
    %1710 = vmatpush1.msra.mxu0 %v1709
    %1711 = vmatprep.subr.mxu0 0.0
    %v1712 = vand.u32 %v95, 4294901760
    %v1713 = vsub.f32 %v95, %v1712
    %v1714 = vand.u32 %v1713, 4294901760
    %1715 = vmatpush1.msra.mxu0 %v1714
    %1716 = vmatprep.subr.mxu0 0.0
    %v1717 = vand.u32 %v96, 4294901760
    %v1718 = vsub.f32 %v96, %v1717
    %v1719 = vand.u32 %v1718, 4294901760
    %1720 = vmatpush1.msra.mxu0 %v1719
    %1721 = vmatprep.subr.mxu0 0.0
    %v1722 = vand.u32 %v97, 4294901760
    %v1723 = vsub.f32 %v97, %v1722
    %v1724 = vand.u32 %v1723, 4294901760
    %1725 = vmatpush1.msra.mxu0 %v1724
    %1726 = vmatprep.subr.mxu0 0.0
    %v1727 = vand.u32 %v98, 4294901760
    %v1728 = vsub.f32 %v98, %v1727
    %v1729 = vand.u32 %v1728, 4294901760
    %1730 = vmatpush1.msra.mxu0 %v1729
    %1731 = vmatprep.subr.mxu0 0.0
    %v1732 = vand.u32 %v99, 4294901760
    %v1733 = vsub.f32 %v99, %v1732
    %v1734 = vand.u32 %v1733, 4294901760
    %1735 = vmatpush1.msra.mxu0 %v1734
    %1736 = vmatprep.subr.mxu0 0.0
    %v1737 = vand.u32 %v100, 4294901760
    %v1738 = vsub.f32 %v100, %v1737
    %v1739 = vand.u32 %v1738, 4294901760
    %1740 = vmatpush1.msra.mxu0 %v1739
    %1741 = vmatprep.subr.mxu0 0.0
    %v1742 = vand.u32 %v101, 4294901760
    %v1743 = vsub.f32 %v101, %v1742
    %v1744 = vand.u32 %v1743, 4294901760
    %1745 = vmatpush1.msra.mxu0 %v1744
    %1746 = vmatprep.subr.mxu0 0.0
    %v1747 = vand.u32 %v102, 4294901760
    %v1748 = vsub.f32 %v102, %v1747
    %v1749 = vand.u32 %v1748, 4294901760
    %1750 = vmatpush1.msra.mxu0 %v1749
    %1751 = vmatprep.subr.mxu0 0.0
    %v1752 = vand.u32 %v103, 4294901760
    %v1753 = vsub.f32 %v103, %v1752
    %v1754 = vand.u32 %v1753, 4294901760
    %1755 = vmatpush1.msra.mxu0 %v1754
    %1756 = vmatprep.subr.mxu0 0.0
    %v1757 = vand.u32 %v104, 4294901760
    %v1758 = vsub.f32 %v104, %v1757
    %v1759 = vand.u32 %v1758, 4294901760
    %1760 = vmatpush1.msra.mxu0 %v1759
    %1761 = vmatprep.subr.mxu0 0.0
    %v1762 = vand.u32 %v105, 4294901760
    %v1763 = vsub.f32 %v105, %v1762
    %v1764 = vand.u32 %v1763, 4294901760
    %1765 = vmatpush1.msra.mxu0 %v1764
    %1766 = vmatprep.subr.mxu0 0.0
    %v1767 = vand.u32 %v106, 4294901760
    %v1768 = vsub.f32 %v106, %v1767
    %v1769 = vand.u32 %v1768, 4294901760
    %1770 = vmatpush1.msra.mxu0 %v1769
    %1771 = vmatprep.subr.mxu0 0.0
    %v1772 = vand.u32 %v107, 4294901760
    %v1773 = vsub.f32 %v107, %v1772
    %v1774 = vand.u32 %v1773, 4294901760
    %1775 = vmatpush1.msra.mxu0 %v1774
    %1776 = vmatprep.subr.mxu0 0.0
    %v1777 = vand.u32 %v108, 4294901760
    %v1778 = vsub.f32 %v108, %v1777
    %v1779 = vand.u32 %v1778, 4294901760
    %1780 = vmatpush1.msra.mxu0 %v1779
    %1781 = vmatprep.subr.mxu0 0.0
    %v1782 = vand.u32 %v109, 4294901760
    %v1783 = vsub.f32 %v109, %v1782
    %v1784 = vand.u32 %v1783, 4294901760
    %1785 = vmatpush1.msra.mxu0 %v1784
    %1786 = vmatprep.subr.mxu0 0.0
    %v1787 = vand.u32 %v110, 4294901760
    %v1788 = vsub.f32 %v110, %v1787
    %v1789 = vand.u32 %v1788, 4294901760
    %1790 = vmatpush1.msra.mxu0 %v1789
    %1791 = vmatprep.subr.mxu0 0.0
    %v1792 = vand.u32 %v111, 4294901760
    %v1793 = vsub.f32 %v111, %v1792
    %v1794 = vand.u32 %v1793, 4294901760
    %1795 = vmatpush1.msra.mxu0 %v1794
    %v1796 = vand.u32 %v46, 4294901760
    %1797 = vmatprep.mubr.f32.mxu0 %v1796
    %v1798 = vand.u32 %v44, 4294901760
    %1799 = vmatmul.mubr.f32.gmra.mrb[0].mxu0 %v1798
    %v1800 = vpop.f32.mrb[0].mxu0
    %v1801 = vadd.f32 %v1622, %v1800
    %v1802 = vpop.f32.mrb[0].mxu0
    %v1803 = vand.u32 %v47, 4294901760
    %1804 = vmatprep.mubr.f32.mxu0 %v1803
    %v1805 = vand.u32 %v45, 4294901760
    %1806 = vmatmul.mubr.f32.gmra.mrb[0].mxu0 %v1805
    %v1807 = vpop.f32.mrb[0].mxu0
    %v1808 = vadd.f32 %v1633, %v1807
    %v1809 = vpop.f32.mrb[0].mxu0
    %1810 = vdwg.mxu0
    %1811 = vmatprep.subr.mxu0 0.0
    %v1812 = vand.u32 %v80, 4294901760
    %1813 = vmatpush1.msra.mxu0 %v1812
    %1814 = vmatprep.subr.mxu0 0.0
    %v1815 = vand.u32 %v81, 4294901760
    %1816 = vmatpush1.msra.mxu0 %v1815
    %1817 = vmatprep.subr.mxu0 0.0
    %v1818 = vand.u32 %v82, 4294901760
    %1819 = vmatpush1.msra.mxu0 %v1818
    %1820 = vmatprep.subr.mxu0 0.0
    %v1821 = vand.u32 %v83, 4294901760
    %1822 = vmatpush1.msra.mxu0 %v1821
    %1823 = vmatprep.subr.mxu0 0.0
    %v1824 = vand.u32 %v84, 4294901760
    %1825 = vmatpush1.msra.mxu0 %v1824
    %1826 = vmatprep.subr.mxu0 0.0
    %v1827 = vand.u32 %v85, 4294901760
    %1828 = vmatpush1.msra.mxu0 %v1827
    %1829 = vmatprep.subr.mxu0 0.0
    %v1830 = vand.u32 %v86, 4294901760
    %1831 = vmatpush1.msra.mxu0 %v1830
    %1832 = vmatprep.subr.mxu0 0.0
    %v1833 = vand.u32 %v87, 4294901760
    %1834 = vmatpush1.msra.mxu0 %v1833
    %1835 = vmatprep.subr.mxu0 0.0
    %v1836 = vand.u32 %v88, 4294901760
    %1837 = vmatpush1.msra.mxu0 %v1836
    %1838 = vmatprep.subr.mxu0 0.0
    %v1839 = vand.u32 %v89, 4294901760
    %1840 = vmatpush1.msra.mxu0 %v1839
    %1841 = vmatprep.subr.mxu0 0.0
    %v1842 = vand.u32 %v90, 4294901760
    %1843 = vmatpush1.msra.mxu0 %v1842
    %1844 = vmatprep.subr.mxu0 0.0
    %v1845 = vand.u32 %v91, 4294901760
    %1846 = vmatpush1.msra.mxu0 %v1845
    %1847 = vmatprep.subr.mxu0 0.0
    %v1848 = vand.u32 %v92, 4294901760
    %1849 = vmatpush1.msra.mxu0 %v1848
    %1850 = vmatprep.subr.mxu0 0.0
    %v1851 = vand.u32 %v93, 4294901760
    %1852 = vmatpush1.msra.mxu0 %v1851
    %1853 = vmatprep.subr.mxu0 0.0
    %v1854 = vand.u32 %v94, 4294901760
    %1855 = vmatpush1.msra.mxu0 %v1854
    %1856 = vmatprep.subr.mxu0 0.0
    %v1857 = vand.u32 %v95, 4294901760
    %1858 = vmatpush1.msra.mxu0 %v1857
    %1859 = vmatprep.subr.mxu0 0.0
    %v1860 = vand.u32 %v96, 4294901760
    %1861 = vmatpush1.msra.mxu0 %v1860
    %1862 = vmatprep.subr.mxu0 0.0
    %v1863 = vand.u32 %v97, 4294901760
    %1864 = vmatpush1.msra.mxu0 %v1863
    %1865 = vmatprep.subr.mxu0 0.0
    %v1866 = vand.u32 %v98, 4294901760
    %1867 = vmatpush1.msra.mxu0 %v1866
    %1868 = vmatprep.subr.mxu0 0.0
    %v1869 = vand.u32 %v99, 4294901760
    %1870 = vmatpush1.msra.mxu0 %v1869
    %1871 = vmatprep.subr.mxu0 0.0
    %v1872 = vand.u32 %v100, 4294901760
    %1873 = vmatpush1.msra.mxu0 %v1872
    %1874 = vmatprep.subr.mxu0 0.0
    %v1875 = vand.u32 %v101, 4294901760
    %1876 = vmatpush1.msra.mxu0 %v1875
    %1877 = vmatprep.subr.mxu0 0.0
    %v1878 = vand.u32 %v102, 4294901760
    %1879 = vmatpush1.msra.mxu0 %v1878
    %1880 = vmatprep.subr.mxu0 0.0
    %v1881 = vand.u32 %v103, 4294901760
    %1882 = vmatpush1.msra.mxu0 %v1881
    %1883 = vmatprep.subr.mxu0 0.0
    %v1884 = vand.u32 %v104, 4294901760
    %1885 = vmatpush1.msra.mxu0 %v1884
    %1886 = vmatprep.subr.mxu0 0.0
    %v1887 = vand.u32 %v105, 4294901760
    %1888 = vmatpush1.msra.mxu0 %v1887
    %1889 = vmatprep.subr.mxu0 0.0
    %v1890 = vand.u32 %v106, 4294901760
    %1891 = vmatpush1.msra.mxu0 %v1890
    %1892 = vmatprep.subr.mxu0 0.0
    %v1893 = vand.u32 %v107, 4294901760
    %1894 = vmatpush1.msra.mxu0 %v1893
    %1895 = vmatprep.subr.mxu0 0.0
    %v1896 = vand.u32 %v108, 4294901760
    %1897 = vmatpush1.msra.mxu0 %v1896
    %1898 = vmatprep.subr.mxu0 0.0
    %v1899 = vand.u32 %v109, 4294901760
    %1900 = vmatpush1.msra.mxu0 %v1899
    %1901 = vmatprep.subr.mxu0 0.0
    %v1902 = vand.u32 %v110, 4294901760
    %1903 = vmatpush1.msra.mxu0 %v1902
    %1904 = vmatprep.subr.mxu0 0.0
    %v1905 = vand.u32 %v111, 4294901760
    %1906 = vmatpush1.msra.mxu0 %v1905
    %v1907 = vand.u32 %v46, 4294901760
    %1908 = vmatprep.mubr.f32.mxu0 %v1907
    %v1909 = vand.u32 %v44, 4294901760
    %1910 = vmatmul.mubr.f32.gmra.mrb[0].mxu0 %v1909
    %v1911 = vpop.f32.mrb[0].mxu0
    %v1912 = vadd.f32 %v1801, %v1911
    %v1913 = vpop.f32.mrb[0].mxu0
    %v1914 = vand.u32 %v47, 4294901760
    %1915 = vmatprep.mubr.f32.mxu0 %v1914
    %v1916 = vand.u32 %v45, 4294901760
    %1917 = vmatmul.mubr.f32.gmra.mrb[0].mxu0 %v1916
    %v1918 = vpop.f32.mrb[0].mxu0
    %v1919 = vadd.f32 %v1808, %v1918
    %v1920 = vpop.f32.mrb[0].mxu0
    %1921 = vdwg.mxu0
    %1922 = vst [vmem:[#allocation7] sm:$0xff] %v1912
    %1923 = vst [vmem:[#allocation7 + $0x8] sm:$0xff] %v1919
    // Predicated region
    $region18: #{tpu_custom_call.1} parent=1 // pred_check
      _
    $region19: #{tpu_custom_call.1} parent=1 // pred_check_branch
      %1925 = sbr.rel (0) target = $region21
    $region20: #{tpu_custom_call.1} parent=1 // pred_region
      %s1927 = ssub.s32 256, 256
      %1928 = vsyncadd [#allocation4], %s1927
      %s1929 = sshll.u32 [#allocation7], 4
      %s1930 = int_to_ptr.vmem [resolvable:$true] %s1929
      %1935 = dma.vmem_to_hbm [thread:$0]  %s1930, 256, %s2, [#allocation4], 128, 128, 8
    $region21: #{tpu_custom_call.1} parent=1 // pred_fallthru
      _
    // Predicated region
    $region22: #{tpu_custom_call.1} parent=1 // pred_check
      _
    $region23: #{tpu_custom_call.1} parent=1 // pred_check_branch
      %1937 = sbr.rel (0) target = $region25
    $region24: #{tpu_custom_call.1} parent=1 // pred_region
      %1938 = dma.done [#allocation4], 256
    $region25: #{tpu_custom_call.1} parent=1 // pred_fallthru
      _
    %1939 = vsyncpa [#allocation3], 1
    %1940 = vsyncpa [#allocation6], 1
    %1941 = vsyncpa [#allocation4], 1

</llo_original>
